<compile_context>
chip_gen: v6e
topology: v6e:2x2x1
jax: 0.10.0
libtpu: 0.0.40
codegen_flags: <defaults>
</compile_context>

<pallas_src>
import functools

import jax
import jax.numpy as jnp
from jax import lax
from jax.experimental import pallas as pl
from jax.experimental.pallas import tpu as pltpu

_EPS = 1e-5


def _row_mask(rows, h):
    """(rows, 1) f32 mask, 1.0 on valid (non H-padding) rows of an image tile."""
    r = lax.broadcasted_iota(jnp.int32, (rows, 1), 0)
    return ((r >= 1) & (r <= h)).astype(jnp.float32)


def _conv3x3(z, b_ref):
    """3x3 'same' conv on a (rows, W*C) image slab.

    dx (width) taps are pre-folded into the block-banded weights b_ref[dy] of
    shape (W*C, W*C); dy = -1/+1 taps are exact sublane rotations (the tile's
    pad rows are zero, so the wrap-around contributes zeros).  Three bf16 MXU
    matmuls, f32 accumulation.
    """
    rows = z.shape[0]
    up = pltpu.roll(z, 1, axis=0)          # up[r] = z[r-1]
    dn = pltpu.roll(z, rows - 1, axis=0)   # dn[r] = z[r+1]
    bf16, f32 = jnp.bfloat16, jnp.float32
    acc = jnp.dot(up.astype(bf16), b_ref[0], preferred_element_type=f32)
    acc = acc + jnp.dot(z.astype(bf16), b_ref[1], preferred_element_type=f32)
    acc = acc + jnp.dot(dn.astype(bf16), b_ref[2], preferred_element_type=f32)
    return acc


def _conv1_kernel(x_ref, b_ref, out_ref, st_ref, *, h):
    """Pass 1: conv1 on one image tile + per-image (sum, sumsq) for BN1."""
    acc = _conv3x3(x_ref[...], b_ref)
    out_ref[...] = acc
    am = acc * _row_mask(acc.shape[0], h)
    st_ref[0:1, :] = jnp.sum(am, axis=0, keepdims=True)
    st_ref[1:2, :] = jnp.sum(am * am, axis=0, keepdims=True)


def _bn1_conv2_kernel(z1_ref, s1_ref, o1_ref, b_ref, out_ref, st_ref, *, h):
    """Pass 2: BN1 (folded scale/offset) -> ReLU -> conv2 + per-image BN2 stats."""
    mask = _row_mask(z1_ref.shape[0], h)
    y1 = jnp.maximum(z1_ref[...] * s1_ref[...] + o1_ref[...], 0.0) * mask
    acc = _conv3x3(y1, b_ref)
    out_ref[...] = acc
    am = acc * mask
    st_ref[0:1, :] = jnp.sum(am, axis=0, keepdims=True)
    st_ref[1:2, :] = jnp.sum(am * am, axis=0, keepdims=True)


def _bn2_residual_kernel(z2_ref, x_ref, s2_ref, o2_ref, out_ref):
    """Pass 3: BN2 (folded scale/offset) -> + identity residual -> ReLU."""
    y2 = z2_ref[...] * s2_ref[...] + o2_ref[...]
    out_ref[...] = jnp.maximum(y2 + x_ref[...], 0.0).astype(out_ref.dtype)


def _banded_conv_weights(w_hwio, width):
    """Fold the dx (width) taps of a 3x3 HWIO kernel into three block-banded
    (width*Cin, width*Cout) matrices (one per dy tap) acting on (rows, W*C)."""
    kh, kw, cin, cout = w_hwio.shape
    win = jnp.arange(width)[None, :, None]
    wout = jnp.arange(width)[None, None, :]
    dx = jnp.arange(kw)[:, None, None]
    ind = (win == wout + dx - 1).astype(w_hwio.dtype)            # (kw, W, W)
    band = jnp.einsum('xab,yxio->yaibo', ind, w_hwio)             # (kh, W, cin, W, cout)
    return band.reshape(kh, width * cin, width * cout).astype(jnp.bfloat16)


def _bn_scale_offset(stats, gamma, beta, width, channels, m):
    """Reduce per-image (sum, sumsq) stats to per-channel BN scale/offset and
    tile over W to match the lane layout.  Tiny per-channel math, plain JAX."""
    s = jnp.sum(stats[:, 0, :], axis=0).reshape(width, channels).sum(axis=0)
    q = jnp.sum(stats[:, 1, :], axis=0).reshape(width, channels).sum(axis=0)
    mean = s / m
    var = jnp.maximum(q / m - mean * mean, 0.0)   # clamp: E[x^2]-mean^2 may dip < 0
    scale = gamma * lax.rsqrt(var + _EPS)
    offset = beta - mean * scale
    wc = width * channels
    return (jnp.tile(scale, width).reshape(1, wc),
            jnp.tile(offset, width).reshape(1, wc))


@jax.jit
def residual_block_forward(x_nchw, params):
    """ResidualBlock forward (stride=1, downsample=None). x_nchw: (N,C,H,W) f32."""
    w1, b1, g1, beta1, w2, b2, g2, beta2 = params
    del b1, b2   # bias before training-mode BN is cancelled exactly by the mean
    N, C, H, W = x_nchw.shape
    assert C == w1.shape[-1], "identity residual requires in_channels == out_channels"
    WC = W * C
    Hp = ((H + 2 + 7) // 8) * 8   # >= 1 zero pad row above/below each image, 8-aligned
    M = N * H * W

    # Lane-dense per-image row layout: (N, Hp, W*C), zero rows padding H.
    x_rows = jnp.transpose(x_nchw, (0, 2, 3, 1)).reshape(N, H, WC)
    x_pad = jnp.pad(x_rows, ((0, 0), (1, Hp - H - 1), (0, 0)))

    # Banded conv weights (dx taps folded in), one (WC, WC) block per dy tap.
    b1s = _banded_conv_weights(w1, W)
    b2s = _banded_conv_weights(w2, W)

    # One image tile per grid step; weights/BN params stay VMEM-resident via
    # constant index maps; activation tiles are double-buffered by BlockSpec.
    # TODO(synk): for production channel counts (C >= 128) switch to a
    # C-on-lanes (N*Hp*W, C) layout with (3C, C)-per-tap weights so the MXU
    # output width reaches 256 (v6e/v7x) and the band's W/3x MAC waste
    # disappears; also tile several images per block for bigger matmul M.
    row_spec = pl.BlockSpec((None, Hp, WC), lambda i: (i, 0, 0))
    wgt_spec = pl.BlockSpec((3, WC, WC), lambda i: (0, 0, 0))
    bn_spec = pl.BlockSpec((1, WC), lambda i: (0, 0))
    st_spec = pl.BlockSpec((None, 2, WC), lambda i: (i, 0, 0))
    cparams = pltpu.CompilerParams(
        dimension_semantics=("parallel",),
        vmem_limit_bytes=32 * 1024 * 1024,   # headroom for v7x's 64 MiB VMEM
    )
    act = jax.ShapeDtypeStruct((N, Hp, WC), jnp.float32)
    st = jax.ShapeDtypeStruct((N, 2, WC), jnp.float32)

    # Pass 1: conv1 + per-image BN1 statistics.
    z1, st1 = pl.pallas_call(
        functools.partial(_conv1_kernel, h=H),
        grid=(N,),
        in_specs=[row_spec, wgt_spec],
        out_specs=(row_spec, st_spec),
        out_shape=(act, st),
        compiler_params=cparams,
    )(x_pad, b1s)
    s1, o1 = _bn_scale_offset(st1, g1, beta1, W, C, M)

    # Pass 2: BN1 -> ReLU -> conv2 + per-image BN2 statistics.
    z2, st2 = pl.pallas_call(
        functools.partial(_bn1_conv2_kernel, h=H),
        grid=(N,),
        in_specs=[row_spec, bn_spec, bn_spec, wgt_spec],
        out_specs=(row_spec, st_spec),
        out_shape=(act, st),
        compiler_params=cparams,
    )(z1, s1, o1, b2s)
    s2, o2 = _bn_scale_offset(st2, g2, beta2, W, C, M)

    # Pass 3: BN2 -> + identity residual -> ReLU.
    out_rows = pl.pallas_call(
        _bn2_residual_kernel,
        grid=(N,),
        in_specs=[row_spec, row_spec, bn_spec, bn_spec],
        out_specs=row_spec,
        out_shape=jax.ShapeDtypeStruct((N, Hp, WC), x_nchw.dtype),
        compiler_params=cparams,
    )(z2, x_pad, s2, o2)

    out = out_rows[:, 1:H + 1, :].reshape(N, H, W, C)
    return jnp.transpose(out, (0, 3, 1, 2))   # back to NCHW


def _ref_forward(x, w1, b1, g1, beta1, w2, b2, g2, beta2):
    """Pure-JAX reference mirroring the PyTorch module (training-mode BN)."""
    def conv(z, w_hwio, b):
        y = lax.conv_general_dilated(z, w_hwio, (1, 1), ((1, 1), (1, 1)),
                                     dimension_numbers=('NCHW', 'HWIO', 'NCHW'))
        return y + b[None, :, None, None]

    def bn(y, g, beta):
        mean = jnp.mean(y, axis=(0, 2, 3), keepdims=True)
        var = jnp.mean((y - mean) ** 2, axis=(0, 2, 3), keepdims=True)
        return ((y - mean) * lax.rsqrt(var + _EPS)
                * g[None, :, None, None] + beta[None, :, None, None])

    y = jax.nn.relu(bn(conv(x, w1, b1), g1, beta1))
    y = bn(conv(y, w2, b2), g2, beta2)
    return jax.nn.relu(y + x)


if __name__ == "__main__":
    key = jax.random.PRNGKey(0)
    N, C, H, W = 2, 8, 16, 16   # in_channels == out_channels (downsample=None, stride=1)
    ks = jax.random.split(key, 9)

    x = jax.random.normal(ks[0], (N, C, H, W), jnp.float32)

    fan_in = 3 * 3 * C
    bound = 1.0 / (fan_in ** 0.5)
    w1 = jax.random.uniform(ks[1], (3, 3, C, C), jnp.float32, -bound, bound)   # HWIO
    b1 = jax.random.uniform(ks[2], (C,), jnp.float32, -bound, bound)
    w2 = jax.random.uniform(ks[3], (3, 3, C, C), jnp.float32, -bound, bound)
    b2 = jax.random.uniform(ks[4], (C,), jnp.float32, -bound, bound)
    g1 = 1.0 + 0.1 * jax.random.normal(ks[5], (C,), jnp.float32)
    beta1 = 0.1 * jax.random.normal(ks[6], (C,), jnp.float32)
    g2 = 1.0 + 0.1 * jax.random.normal(ks[7], (C,), jnp.float32)
    beta2 = 0.1 * jax.random.normal(ks[8], (C,), jnp.float32)

    params = (w1, b1, g1, beta1, w2, b2, g2, beta2)

    out = jax.block_until_ready(residual_block_forward(x, params))
    ref = _ref_forward(x, w1, b1, g1, beta1, w2, b2, g2, beta2)

    assert out.shape == ref.shape == (N, C, H, W)
    max_err = float(jnp.max(jnp.abs(out - ref)))
    # bf16 MXU conv matmuls (f32 accumulation) vs f32 reference => relaxed tol.
    assert jnp.allclose(out, ref, atol=3e-2, rtol=3e-2), f"max err {max_err}"

    print("KERNEL_OK")
</pallas_src>

<mosaic_0001>
module attributes {stable_mosaic.version = 11 : i64} {
  func.func @_conv1_kernel(%arg0: i32, %arg1: memref<1x24x128xf32, #tpu.memory_space<vmem>>, %arg2: memref<3x128x128xbf16, #tpu.memory_space<vmem>>, %arg3: memref<1x24x128xf32, #tpu.memory_space<vmem>>, %arg4: memref<1x2x128xf32, #tpu.memory_space<vmem>>) attributes {dimension_semantics = [#tpu.dimension_semantics<parallel>], iteration_bounds = array<i64: 2>, scalar_prefetch = 0 : i64, scratch_operands = 0 : i64, tpu.core_type = #tpu.core_type<tc>, window_params = [{transform_indices = @transform_0, window_bounds = array<i64: 1, 24, 128>}, {pipeline_mode = #tpu.pipeline_mode<synchronous>, transform_indices = @transform_1, window_bounds = array<i64: 3, 128, 128>}, {transform_indices = @transform_2, window_bounds = array<i64: 1, 24, 128>}, {transform_indices = @transform_3, window_bounds = array<i64: 1, 2, 128>}]} {
    %c0 = arith.constant 0 : index
    %c0_0 = arith.constant 0 : index
    %c0_1 = arith.constant 0 : index
    %0 = vector.load %arg1[%c0, %c0_0, %c0_1] : memref<1x24x128xf32, #tpu.memory_space<vmem>>, vector<1x24x128xf32>
    %1 = vector.shape_cast %0 : vector<1x24x128xf32> to vector<24x128xf32>
    %c1_i32 = arith.constant 1 : i32
    %2 = tpu.dynamic_rotate %1 by %c1_i32 dim 0 : vector<24x128xf32>, i32 -> vector<24x128xf32>
    %c23_i32 = arith.constant 23 : i32
    %3 = tpu.dynamic_rotate %1 by %c23_i32 dim 0 : vector<24x128xf32>, i32 -> vector<24x128xf32>
    %4 = arith.truncf %2 : vector<24x128xf32> to vector<24x128xbf16>
    %c0_2 = arith.constant 0 : index
    %c0_3 = arith.constant 0 : index
    %c0_4 = arith.constant 0 : index
    %5 = vector.load %arg2[%c0_2, %c0_3, %c0_4] : memref<3x128x128xbf16, #tpu.memory_space<vmem>>, vector<1x128x128xbf16>
    %6 = vector.shape_cast %5 : vector<1x128x128xbf16> to vector<128x128xbf16>
    %cst = arith.constant dense<0.000000e+00> : vector<24x128xf32>
    %7 = tpu.matmul %4, %6, %cst {dimension_numbers = #tpu.dot_dimension_numbers<[1], [0], [0], [1], [0, 0, 1, 1], [], []>} : vector<24x128xbf16>, vector<128x128xbf16>, vector<24x128xf32> -> vector<24x128xf32>
    %8 = arith.truncf %1 : vector<24x128xf32> to vector<24x128xbf16>
    %c1 = arith.constant 1 : index
    %c0_5 = arith.constant 0 : index
    %c0_6 = arith.constant 0 : index
    %9 = vector.load %arg2[%c1, %c0_5, %c0_6] : memref<3x128x128xbf16, #tpu.memory_space<vmem>>, vector<1x128x128xbf16>
    %10 = vector.shape_cast %9 : vector<1x128x128xbf16> to vector<128x128xbf16>
    %cst_7 = arith.constant dense<0.000000e+00> : vector<24x128xf32>
    %11 = tpu.matmul %8, %10, %cst_7 {dimension_numbers = #tpu.dot_dimension_numbers<[1], [0], [0], [1], [0, 0, 1, 1], [], []>} : vector<24x128xbf16>, vector<128x128xbf16>, vector<24x128xf32> -> vector<24x128xf32>
    %12 = arith.addf %7, %11 : vector<24x128xf32>
    %13 = arith.truncf %3 : vector<24x128xf32> to vector<24x128xbf16>
    %c2 = arith.constant 2 : index
    %c0_8 = arith.constant 0 : index
    %c0_9 = arith.constant 0 : index
    %14 = vector.load %arg2[%c2, %c0_8, %c0_9] : memref<3x128x128xbf16, #tpu.memory_space<vmem>>, vector<1x128x128xbf16>
    %15 = vector.shape_cast %14 : vector<1x128x128xbf16> to vector<128x128xbf16>
    %cst_10 = arith.constant dense<0.000000e+00> : vector<24x128xf32>
    %16 = tpu.matmul %13, %15, %cst_10 {dimension_numbers = #tpu.dot_dimension_numbers<[1], [0], [0], [1], [0, 0, 1, 1], [], []>} : vector<24x128xbf16>, vector<128x128xbf16>, vector<24x128xf32> -> vector<24x128xf32>
    %17 = arith.addf %12, %16 : vector<24x128xf32>
    %c0_11 = arith.constant 0 : index
    %c0_12 = arith.constant 0 : index
    %c0_13 = arith.constant 0 : index
    %18 = vector.load %arg3[%c0_11, %c0_12, %c0_13] : memref<1x24x128xf32, #tpu.memory_space<vmem>>, vector<1x24x128xf32>
    %19 = vector.shape_cast %18 : vector<1x24x128xf32> to vector<24x128xf32>
    %20 = vector.shape_cast %17 : vector<24x128xf32> to vector<1x24x128xf32>
    tpu.vector_store %arg3[%c0_11, %c0_12, %c0_13], %20 {strides = array<i32>} : memref<1x24x128xf32, #tpu.memory_space<vmem>>, vector<1x24x128xf32>,
    %21 = tpu.iota {dimensions = array<i32: 0>} : vector<24x1xi32>
    %c1_i32_14 = arith.constant 1 : i32
    %22 = vector.broadcast %c1_i32_14 : i32 to vector<24x1xi32>
    %23 = arith.cmpi sge, %21, %22 : vector<24x1xi32>
    %c16_i32 = arith.constant 16 : i32
    %24 = vector.broadcast %c16_i32 : i32 to vector<24x1xi32>
    %25 = arith.cmpi sle, %21, %24 : vector<24x1xi32>
    %26 = arith.andi %23, %25 : vector<24x1xi1>
    %27 = arith.extui %26 : vector<24x1xi1> to vector<24x1xi32>
    %28 = arith.sitofp %27 : vector<24x1xi32> to vector<24x1xf32>
    %29 = vector.broadcast %28 : vector<24x1xf32> to vector<24x128xf32>
    %30 = arith.mulf %17, %29 : vector<24x128xf32>
    %cst_15 = arith.constant dense<0.000000e+00> : vector<128xf32>
    %31 = vector.multi_reduction <add>, %30, %cst_15 [0] : vector<24x128xf32> to vector<128xf32>
    %32 = vector.shape_cast %31 : vector<128xf32> to vector<1x128xf32>
    %c0_16 = arith.constant 0 : index
    %c0_17 = arith.constant 0 : index
    %c0_18 = arith.constant 0 : index
    %33 = vector.load %arg4[%c0_16, %c0_17, %c0_18] : memref<1x2x128xf32, #tpu.memory_space<vmem>>, vector<1x1x128xf32>
    %34 = vector.shape_cast %33 : vector<1x1x128xf32> to vector<1x128xf32>
    %35 = vector.shape_cast %32 : vector<1x128xf32> to vector<1x1x128xf32>
    tpu.vector_store %arg4[%c0_16, %c0_17, %c0_18], %35 {strides = array<i32>} : memref<1x2x128xf32, #tpu.memory_space<vmem>>, vector<1x1x128xf32>,
    %36 = arith.mulf %30, %30 : vector<24x128xf32>
    %cst_19 = arith.constant dense<0.000000e+00> : vector<128xf32>
    %37 = vector.multi_reduction <add>, %36, %cst_19 [0] : vector<24x128xf32> to vector<128xf32>
    %38 = vector.shape_cast %37 : vector<128xf32> to vector<1x128xf32>
    %c0_20 = arith.constant 0 : index
    %c1_21 = arith.constant 1 : index
    %c0_22 = arith.constant 0 : index
    %39 = vector.load %arg4[%c0_20, %c1_21, %c0_22] : memref<1x2x128xf32, #tpu.memory_space<vmem>>, vector<1x1x128xf32>
    %40 = vector.shape_cast %39 : vector<1x1x128xf32> to vector<1x128xf32>
    %41 = vector.shape_cast %38 : vector<1x128xf32> to vector<1x1x128xf32>
    tpu.vector_store %arg4[%c0_20, %c1_21, %c0_22], %41 {strides = array<i32>} : memref<1x2x128xf32, #tpu.memory_space<vmem>>, vector<1x1x128xf32>,
    return
  }
  func.func @transform_0(%arg0: i32) -> (i32, i32, i32) {
    %c0_i32 = arith.constant 0 : i32
    %c0_i32_0 = arith.constant 0 : i32
    %c0_i32_1 = arith.constant 0 : i32
    return %arg0, %c0_i32, %c0_i32_0 : i32, i32, i32
  }
  func.func @transform_1(%arg0: i32) -> (i32, i32, i32) {
    %c0_i32 = arith.constant 0 : i32
    %c0_i32_0 = arith.constant 0 : i32
    %c0_i32_1 = arith.constant 0 : i32
    %c0_i32_2 = arith.constant 0 : i32
    return %c0_i32, %c0_i32_0, %c0_i32_1 : i32, i32, i32
  }
  func.func @transform_2(%arg0: i32) -> (i32, i32, i32) {
    %c0_i32 = arith.constant 0 : i32
    %c0_i32_0 = arith.constant 0 : i32
    %c0_i32_1 = arith.constant 0 : i32
    return %arg0, %c0_i32, %c0_i32_0 : i32, i32, i32
  }
  func.func @transform_3(%arg0: i32) -> (i32, i32, i32) {
    %c0_i32 = arith.constant 0 : i32
    %c0_i32_0 = arith.constant 0 : i32
    %c0_i32_1 = arith.constant 0 : i32
    return %arg0, %c0_i32, %c0_i32_0 : i32, i32, i32
  }
}

module attributes {stable_mosaic.version = 11 : i64} {
  func.func @_bn2_residual_kernel(%arg0: i32, %arg1: memref<1x24x128xf32, #tpu.memory_space<vmem>>, %arg2: memref<1x24x128xf32, #tpu.memory_space<vmem>>, %arg3: memref<1x128xf32, #tpu.memory_space<vmem>>, %arg4: memref<1x128xf32, #tpu.memory_space<vmem>>, %arg5: memref<1x24x128xf32, #tpu.memory_space<vmem>>) attributes {dimension_semantics = [#tpu.dimension_semantics<parallel>], iteration_bounds = array<i64: 2>, scalar_prefetch = 0 : i64, scratch_operands = 0 : i64, tpu.core_type = #tpu.core_type<tc>, window_params = [{transform_indices = @transform_0, window_bounds = array<i64: 1, 24, 128>}, {transform_indices = @transform_1, window_bounds = array<i64: 1, 24, 128>}, {pipeline_mode = #tpu.pipeline_mode<synchronous>, transform_indices = @transform_2, window_bounds = array<i64: 1, 128>}, {pipeline_mode = #tpu.pipeline_mode<synchronous>, transform_indices = @transform_3, window_bounds = array<i64: 1, 128>}, {transform_indices = @transform_4, window_bounds = array<i64: 1, 24, 128>}]} {
    %c0 = arith.constant 0 : index
    %c0_0 = arith.constant 0 : index
    %c0_1 = arith.constant 0 : index
    %0 = vector.load %arg1[%c0, %c0_0, %c0_1] : memref<1x24x128xf32, #tpu.memory_space<vmem>>, vector<1x24x128xf32>
    %1 = vector.shape_cast %0 : vector<1x24x128xf32> to vector<24x128xf32>
    %c0_2 = arith.constant 0 : index
    %c0_3 = arith.constant 0 : index
    %2 = vector.load %arg3[%c0_2, %c0_3] : memref<1x128xf32, #tpu.memory_space<vmem>>, vector<1x128xf32>
    %3 = vector.broadcast %2 : vector<1x128xf32> to vector<24x128xf32>
    %4 = arith.mulf %1, %3 : vector<24x128xf32>
    %c0_4 = arith.constant 0 : index
    %c0_5 = arith.constant 0 : index
    %5 = vector.load %arg4[%c0_4, %c0_5] : memref<1x128xf32, #tpu.memory_space<vmem>>, vector<1x128xf32>
    %6 = vector.broadcast %5 : vector<1x128xf32> to vector<24x128xf32>
    %7 = arith.addf %4, %6 : vector<24x128xf32>
    %c0_6 = arith.constant 0 : index
    %c0_7 = arith.constant 0 : index
    %c0_8 = arith.constant 0 : index
    %8 = vector.load %arg2[%c0_6, %c0_7, %c0_8] : memref<1x24x128xf32, #tpu.memory_space<vmem>>, vector<1x24x128xf32>
    %9 = vector.shape_cast %8 : vector<1x24x128xf32> to vector<24x128xf32>
    %10 = arith.addf %7, %9 : vector<24x128xf32>
    %cst = arith.constant 0.000000e+00 : f32
    %11 = vector.broadcast %cst : f32 to vector<24x128xf32>
    %12 = arith.maximumf %10, %11 : vector<24x128xf32>
    %c0_9 = arith.constant 0 : index
    %c0_10 = arith.constant 0 : index
    %c0_11 = arith.constant 0 : index
    %13 = vector.load %arg5[%c0_9, %c0_10, %c0_11] : memref<1x24x128xf32, #tpu.memory_space<vmem>>, vector<1x24x128xf32>
    %14 = vector.shape_cast %13 : vector<1x24x128xf32> to vector<24x128xf32>
    %15 = vector.shape_cast %12 : vector<24x128xf32> to vector<1x24x128xf32>
    tpu.vector_store %arg5[%c0_9, %c0_10, %c0_11], %15 {strides = array<i32>} : memref<1x24x128xf32, #tpu.memory_space<vmem>>, vector<1x24x128xf32>,
    return
  }
  func.func @transform_0(%arg0: i32) -> (i32, i32, i32) {
    %c0_i32 = arith.constant 0 : i32
    %c0_i32_0 = arith.constant 0 : i32
    %c0_i32_1 = arith.constant 0 : i32
    return %arg0, %c0_i32, %c0_i32_0 : i32, i32, i32
  }
  func.func @transform_1(%arg0: i32) -> (i32, i32, i32) {
    %c0_i32 = arith.constant 0 : i32
    %c0_i32_0 = arith.constant 0 : i32
    %c0_i32_1 = arith.constant 0 : i32
    return %arg0, %c0_i32, %c0_i32_0 : i32, i32, i32
  }
  func.func @transform_2(%arg0: i32) -> (i32, i32) {
    %c0_i32 = arith.constant 0 : i32
    %c0_i32_0 = arith.constant 0 : i32
    %c0_i32_1 = arith.constant 0 : i32
    return %c0_i32, %c0_i32_0 : i32, i32
  }
  func.func @transform_3(%arg0: i32) -> (i32, i32) {
    %c0_i32 = arith.constant 0 : i32
    %c0_i32_0 = arith.constant 0 : i32
    %c0_i32_1 = arith.constant 0 : i32
    return %c0_i32, %c0_i32_0 : i32, i32
  }
  func.func @transform_4(%arg0: i32) -> (i32, i32, i32) {
    %c0_i32 = arith.constant 0 : i32
    %c0_i32_0 = arith.constant 0 : i32
    %c0_i32_1 = arith.constant 0 : i32
    return %arg0, %c0_i32, %c0_i32_0 : i32, i32, i32
  }
}

module attributes {stable_mosaic.version = 11 : i64} {
  func.func @_bn1_conv2_kernel(%arg0: i32, %arg1: memref<1x24x128xf32, #tpu.memory_space<vmem>>, %arg2: memref<1x128xf32, #tpu.memory_space<vmem>>, %arg3: memref<1x128xf32, #tpu.memory_space<vmem>>, %arg4: memref<3x128x128xbf16, #tpu.memory_space<vmem>>, %arg5: memref<1x24x128xf32, #tpu.memory_space<vmem>>, %arg6: memref<1x2x128xf32, #tpu.memory_space<vmem>>) attributes {dimension_semantics = [#tpu.dimension_semantics<parallel>], iteration_bounds = array<i64: 2>, scalar_prefetch = 0 : i64, scratch_operands = 0 : i64, tpu.core_type = #tpu.core_type<tc>, window_params = [{transform_indices = @transform_0, window_bounds = array<i64: 1, 24, 128>}, {pipeline_mode = #tpu.pipeline_mode<synchronous>, transform_indices = @transform_1, window_bounds = array<i64: 1, 128>}, {pipeline_mode = #tpu.pipeline_mode<synchronous>, transform_indices = @transform_2, window_bounds = array<i64: 1, 128>}, {pipeline_mode = #tpu.pipeline_mode<synchronous>, transform_indices = @transform_3, window_bounds = array<i64: 3, 128, 128>}, {transform_indices = @transform_4, window_bounds = array<i64: 1, 24, 128>}, {transform_indices = @transform_5, window_bounds = array<i64: 1, 2, 128>}]} {
    %0 = tpu.iota {dimensions = array<i32: 0>} : vector<24x1xi32>
    %c1_i32 = arith.constant 1 : i32
    %1 = vector.broadcast %c1_i32 : i32 to vector<24x1xi32>
    %2 = arith.cmpi sge, %0, %1 : vector<24x1xi32>
    %c16_i32 = arith.constant 16 : i32
    %3 = vector.broadcast %c16_i32 : i32 to vector<24x1xi32>
    %4 = arith.cmpi sle, %0, %3 : vector<24x1xi32>
    %5 = arith.andi %2, %4 : vector<24x1xi1>
    %6 = arith.extui %5 : vector<24x1xi1> to vector<24x1xi32>
    %7 = arith.sitofp %6 : vector<24x1xi32> to vector<24x1xf32>
    %c0 = arith.constant 0 : index
    %c0_0 = arith.constant 0 : index
    %c0_1 = arith.constant 0 : index
    %8 = vector.load %arg1[%c0, %c0_0, %c0_1] : memref<1x24x128xf32, #tpu.memory_space<vmem>>, vector<1x24x128xf32>
    %9 = vector.shape_cast %8 : vector<1x24x128xf32> to vector<24x128xf32>
    %c0_2 = arith.constant 0 : index
    %c0_3 = arith.constant 0 : index
    %10 = vector.load %arg2[%c0_2, %c0_3] : memref<1x128xf32, #tpu.memory_space<vmem>>, vector<1x128xf32>
    %11 = vector.broadcast %10 : vector<1x128xf32> to vector<24x128xf32>
    %12 = arith.mulf %9, %11 : vector<24x128xf32>
    %c0_4 = arith.constant 0 : index
    %c0_5 = arith.constant 0 : index
    %13 = vector.load %arg3[%c0_4, %c0_5] : memref<1x128xf32, #tpu.memory_space<vmem>>, vector<1x128xf32>
    %14 = vector.broadcast %13 : vector<1x128xf32> to vector<24x128xf32>
    %15 = arith.addf %12, %14 : vector<24x128xf32>
    %cst = arith.constant 0.000000e+00 : f32
    %16 = vector.broadcast %cst : f32 to vector<24x128xf32>
    %17 = arith.maximumf %15, %16 : vector<24x128xf32>
    %18 = vector.broadcast %7 : vector<24x1xf32> to vector<24x128xf32>
    %19 = arith.mulf %17, %18 : vector<24x128xf32>
    %c1_i32_6 = arith.constant 1 : i32
    %20 = tpu.dynamic_rotate %19 by %c1_i32_6 dim 0 : vector<24x128xf32>, i32 -> vector<24x128xf32>
    %c23_i32 = arith.constant 23 : i32
    %21 = tpu.dynamic_rotate %19 by %c23_i32 dim 0 : vector<24x128xf32>, i32 -> vector<24x128xf32>
    %22 = arith.truncf %20 : vector<24x128xf32> to vector<24x128xbf16>
    %c0_7 = arith.constant 0 : index
    %c0_8 = arith.constant 0 : index
    %c0_9 = arith.constant 0 : index
    %23 = vector.load %arg4[%c0_7, %c0_8, %c0_9] : memref<3x128x128xbf16, #tpu.memory_space<vmem>>, vector<1x128x128xbf16>
    %24 = vector.shape_cast %23 : vector<1x128x128xbf16> to vector<128x128xbf16>
    %cst_10 = arith.constant dense<0.000000e+00> : vector<24x128xf32>
    %25 = tpu.matmul %22, %24, %cst_10 {dimension_numbers = #tpu.dot_dimension_numbers<[1], [0], [0], [1], [0, 0, 1, 1], [], []>} : vector<24x128xbf16>, vector<128x128xbf16>, vector<24x128xf32> -> vector<24x128xf32>
    %26 = arith.truncf %19 : vector<24x128xf32> to vector<24x128xbf16>
    %c1 = arith.constant 1 : index
    %c0_11 = arith.constant 0 : index
    %c0_12 = arith.constant 0 : index
    %27 = vector.load %arg4[%c1, %c0_11, %c0_12] : memref<3x128x128xbf16, #tpu.memory_space<vmem>>, vector<1x128x128xbf16>
    %28 = vector.shape_cast %27 : vector<1x128x128xbf16> to vector<128x128xbf16>
    %cst_13 = arith.constant dense<0.000000e+00> : vector<24x128xf32>
    %29 = tpu.matmul %26, %28, %cst_13 {dimension_numbers = #tpu.dot_dimension_numbers<[1], [0], [0], [1], [0, 0, 1, 1], [], []>} : vector<24x128xbf16>, vector<128x128xbf16>, vector<24x128xf32> -> vector<24x128xf32>
    %30 = arith.addf %25, %29 : vector<24x128xf32>
    %31 = arith.truncf %21 : vector<24x128xf32> to vector<24x128xbf16>
    %c2 = arith.constant 2 : index
    %c0_14 = arith.constant 0 : index
    %c0_15 = arith.constant 0 : index
    %32 = vector.load %arg4[%c2, %c0_14, %c0_15] : memref<3x128x128xbf16, #tpu.memory_space<vmem>>, vector<1x128x128xbf16>
    %33 = vector.shape_cast %32 : vector<1x128x128xbf16> to vector<128x128xbf16>
    %cst_16 = arith.constant dense<0.000000e+00> : vector<24x128xf32>
    %34 = tpu.matmul %31, %33, %cst_16 {dimension_numbers = #tpu.dot_dimension_numbers<[1], [0], [0], [1], [0, 0, 1, 1], [], []>} : vector<24x128xbf16>, vector<128x128xbf16>, vector<24x128xf32> -> vector<24x128xf32>
    %35 = arith.addf %30, %34 : vector<24x128xf32>
    %c0_17 = arith.constant 0 : index
    %c0_18 = arith.constant 0 : index
    %c0_19 = arith.constant 0 : index
    %36 = vector.load %arg5[%c0_17, %c0_18, %c0_19] : memref<1x24x128xf32, #tpu.memory_space<vmem>>, vector<1x24x128xf32>
    %37 = vector.shape_cast %36 : vector<1x24x128xf32> to vector<24x128xf32>
    %38 = vector.shape_cast %35 : vector<24x128xf32> to vector<1x24x128xf32>
    tpu.vector_store %arg5[%c0_17, %c0_18, %c0_19], %38 {strides = array<i32>} : memref<1x24x128xf32, #tpu.memory_space<vmem>>, vector<1x24x128xf32>,
    %39 = vector.broadcast %7 : vector<24x1xf32> to vector<24x128xf32>
    %40 = arith.mulf %35, %39 : vector<24x128xf32>
    %cst_20 = arith.constant dense<0.000000e+00> : vector<128xf32>
    %41 = vector.multi_reduction <add>, %40, %cst_20 [0] : vector<24x128xf32> to vector<128xf32>
    %42 = vector.shape_cast %41 : vector<128xf32> to vector<1x128xf32>
    %c0_21 = arith.constant 0 : index
    %c0_22 = arith.constant 0 : index
    %c0_23 = arith.constant 0 : index
    %43 = vector.load %arg6[%c0_21, %c0_22, %c0_23] : memref<1x2x128xf32, #tpu.memory_space<vmem>>, vector<1x1x128xf32>
    %44 = vector.shape_cast %43 : vector<1x1x128xf32> to vector<1x128xf32>
    %45 = vector.shape_cast %42 : vector<1x128xf32> to vector<1x1x128xf32>
    tpu.vector_store %arg6[%c0_21, %c0_22, %c0_23], %45 {strides = array<i32>} : memref<1x2x128xf32, #tpu.memory_space<vmem>>, vector<1x1x128xf32>,
    %46 = arith.mulf %40, %40 : vector<24x128xf32>
    %cst_24 = arith.constant dense<0.000000e+00> : vector<128xf32>
    %47 = vector.multi_reduction <add>, %46, %cst_24 [0] : vector<24x128xf32> to vector<128xf32>
    %48 = vector.shape_cast %47 : vector<128xf32> to vector<1x128xf32>
    %c0_25 = arith.constant 0 : index
    %c1_26 = arith.constant 1 : index
    %c0_27 = arith.constant 0 : index
    %49 = vector.load %arg6[%c0_25, %c1_26, %c0_27] : memref<1x2x128xf32, #tpu.memory_space<vmem>>, vector<1x1x128xf32>
    %50 = vector.shape_cast %49 : vector<1x1x128xf32> to vector<1x128xf32>
    %51 = vector.shape_cast %48 : vector<1x128xf32> to vector<1x1x128xf32>
    tpu.vector_store %arg6[%c0_25, %c1_26, %c0_27], %51 {strides = array<i32>} : memref<1x2x128xf32, #tpu.memory_space<vmem>>, vector<1x1x128xf32>,
    return
  }
  func.func @transform_0(%arg0: i32) -> (i32, i32, i32) {
    %c0_i32 = arith.constant 0 : i32
    %c0_i32_0 = arith.constant 0 : i32
    %c0_i32_1 = arith.constant 0 : i32
    return %arg0, %c0_i32, %c0_i32_0 : i32, i32, i32
  }
  func.func @transform_1(%arg0: i32) -> (i32, i32) {
    %c0_i32 = arith.constant 0 : i32
    %c0_i32_0 = arith.constant 0 : i32
    %c0_i32_1 = arith.constant 0 : i32
    return %c0_i32, %c0_i32_0 : i32, i32
  }
  func.func @transform_2(%arg0: i32) -> (i32, i32) {
    %c0_i32 = arith.constant 0 : i32
    %c0_i32_0 = arith.constant 0 : i32
    %c0_i32_1 = arith.constant 0 : i32
    return %c0_i32, %c0_i32_0 : i32, i32
  }
  func.func @transform_3(%arg0: i32) -> (i32, i32, i32) {
    %c0_i32 = arith.constant 0 : i32
    %c0_i32_0 = arith.constant 0 : i32
    %c0_i32_1 = arith.constant 0 : i32
    %c0_i32_2 = arith.constant 0 : i32
    return %c0_i32, %c0_i32_0, %c0_i32_1 : i32, i32, i32
  }
  func.func @transform_4(%arg0: i32) -> (i32, i32, i32) {
    %c0_i32 = arith.constant 0 : i32
    %c0_i32_0 = arith.constant 0 : i32
    %c0_i32_1 = arith.constant 0 : i32
    return %arg0, %c0_i32, %c0_i32_0 : i32, i32, i32
  }
  func.func @transform_5(%arg0: i32) -> (i32, i32, i32) {
    %c0_i32 = arith.constant 0 : i32
    %c0_i32_0 = arith.constant 0 : i32
    %c0_i32_1 = arith.constant 0 : i32
    return %arg0, %c0_i32, %c0_i32_0 : i32, i32, i32
  }
}

</mosaic_0001>

<llo_original>
// kernel: tile.23
$region0: #{tile.23}
  #allocation0 [shape = 's32[1]{0}', space=sflag, size = 0x4, scoped, tag = 'scoped memory for tile.23']
  %s0 = inlined_call_operand.vmem [shape: f32[8], index: 0, kind: input, shape index: {}]
  %s1 = inlined_call_operand.vmem [shape: f32[16,8], index: 1, kind: output, shape index: {}]
  // Predicated region
  $region2: #{tile.23} parent=0 // pred_check
    _
  $region3: #{tile.23} parent=0 // pred_check_branch
    %3 = sbr.rel (0) target = $region5
  $region4: #{tile.23} parent=0 // pred_region
    _
  $region5: #{tile.23} parent=0 // pred_fallthru
    _
  %v4 = vld [vmem:[%s0] ss:$0 sm:$0xff]
  %5 = vst [vmem:[%s1] sm:$0xff] %v4
  %s6 = scalar_lea.vmem %s1, 8
  %7 = vst [vmem:[%s6] sm:$0xff] %v4

// kernel: tile.24
$region0: #{tile.24}
  %s0 = inlined_call_operand.vmem [shape: f32[16,8], index: 0, kind: input, shape index: {}]
  %s1 = inlined_call_operand.vmem [shape: f32[1,128], index: 1, kind: output, shape index: {}]
  $region1: #{tile.24} parent=0
    #allocation0 [shape = 'u8[4096]{0}', space=vmem, size = 0x1000, scoped, tag = 'scoped mem for output reshape']
    %v2 = vld [vmem:[%s0] sm:$0x1]
    %vm3 = vcmask 64512
    %4 = vst.msk [vmem:[#allocation0] sm:$0x1] %vm3, %v2
    %s5 = scalar_lea.vmem %s0, 15
    %v6 = vld [vmem:[%s5] sm:$0x1]
    %7 = vrot.lane.b32.xlu0 %v6, 120
    %v8 = vpop.permute.xlu0 %7
    %vm9 = vcmask 1048512
    %10 = vst.msk [vmem:[#allocation0] sm:$0x1] %vm9, %v8
    %s11 = scalar_lea.vmem %s0, 14
    %v12 = vld [vmem:[%s11] sm:$0x1]
    %13 = vrot.lane.b32.xlu0 %v12, 112
    %v14 = vpop.permute.xlu0 %13
    %vm15 = vcmask 982912
    %16 = vst.msk [vmem:[#allocation0] sm:$0x1] %vm15, %v14
    %s17 = scalar_lea.vmem %s0, 13
    %v18 = vld [vmem:[%s17] sm:$0x1]
    %19 = vrot.lane.b32.xlu0 %v18, 104
    %v20 = vpop.permute.xlu0 %19
    %vm21 = vcmask 917312
    %22 = vst.msk [vmem:[#allocation0] sm:$0x1] %vm21, %v20
    %s23 = scalar_lea.vmem %s0, 12
    %v24 = vld [vmem:[%s23] sm:$0x1]
    %25 = vrot.lane.b32.xlu0 %v24, 96
    %v26 = vpop.permute.xlu0 %25
    %vm27 = vcmask 851712
    %28 = vst.msk [vmem:[#allocation0] sm:$0x1] %vm27, %v26
    %s29 = scalar_lea.vmem %s0, 11
    %v30 = vld [vmem:[%s29] sm:$0x1]
    %31 = vrot.lane.b32.xlu0 %v30, 88
    %v32 = vpop.permute.xlu0 %31
    %vm33 = vcmask 786112
    %34 = vst.msk [vmem:[#allocation0] sm:$0x1] %vm33, %v32
    %s35 = scalar_lea.vmem %s0, 10
    %v36 = vld [vmem:[%s35] sm:$0x1]
    %37 = vrot.lane.b32.xlu0 %v36, 80
    %v38 = vpop.permute.xlu0 %37
    %vm39 = vcmask 720512
    %40 = vst.msk [vmem:[#allocation0] sm:$0x1] %vm39, %v38
    %s41 = scalar_lea.vmem %s0, 9
    %v42 = vld [vmem:[%s41] sm:$0x1]
    %43 = vrot.lane.b32.xlu0 %v42, 72
    %v44 = vpop.permute.xlu0 %43
    %vm45 = vcmask 654912
    %46 = vst.msk [vmem:[#allocation0] sm:$0x1] %vm45, %v44
    %s47 = scalar_lea.vmem %s0, 8
    %v48 = vld [vmem:[%s47] sm:$0x1]
    %49 = vrot.lane.b32.xlu0 %v48, 64
    %v50 = vpop.permute.xlu0 %49
    %vm51 = vcmask 589312
    %52 = vst.msk [vmem:[#allocation0] sm:$0x1] %vm51, %v50
    %s53 = scalar_lea.vmem %s0, 7
    %v54 = vld [vmem:[%s53] sm:$0x1]
    %55 = vrot.lane.b32.xlu0 %v54, 56
    %v56 = vpop.permute.xlu0 %55
    %vm57 = vcmask 523712
    %58 = vst.msk [vmem:[#allocation0] sm:$0x1] %vm57, %v56
    %s59 = scalar_lea.vmem %s0, 6
    %v60 = vld [vmem:[%s59] sm:$0x1]
    %61 = vrot.lane.b32.xlu0 %v60, 48
    %v62 = vpop.permute.xlu0 %61
    %vm63 = vcmask 458112
    %64 = vst.msk [vmem:[#allocation0] sm:$0x1] %vm63, %v62
    %s65 = scalar_lea.vmem %s0, 5
    %v66 = vld [vmem:[%s65] sm:$0x1]
    %67 = vrot.lane.b32.xlu0 %v66, 40
    %v68 = vpop.permute.xlu0 %67
    %vm69 = vcmask 392512
    %70 = vst.msk [vmem:[#allocation0] sm:$0x1] %vm69, %v68
    %s71 = scalar_lea.vmem %s0, 4
    %v72 = vld [vmem:[%s71] sm:$0x1]
    %73 = vrot.lane.b32.xlu0 %v72, 32
    %v74 = vpop.permute.xlu0 %73
    %vm75 = vcmask 326912
    %76 = vst.msk [vmem:[#allocation0] sm:$0x1] %vm75, %v74
    %s77 = scalar_lea.vmem %s0, 3
    %v78 = vld [vmem:[%s77] sm:$0x1]
    %79 = vrot.lane.b32.xlu0 %v78, 24
    %v80 = vpop.permute.xlu0 %79
    %vm81 = vcmask 261312
    %82 = vst.msk [vmem:[#allocation0] sm:$0x1] %vm81, %v80
    %s83 = scalar_lea.vmem %s0, 2
    %v84 = vld [vmem:[%s83] sm:$0x1]
    %85 = vrot.lane.b32.xlu0 %v84, 16
    %v86 = vpop.permute.xlu0 %85
    %vm87 = vcmask 195712
    %88 = vst.msk [vmem:[#allocation0] sm:$0x1] %vm87, %v86
    %s89 = scalar_lea.vmem %s0, 1
    %v90 = vld [vmem:[%s89] sm:$0x1]
    %91 = vrot.lane.b32.xlu0 %v90, 8
    %v92 = vpop.permute.xlu0 %91
    %vm93 = vcmask 130112
    %94 = vst.msk [vmem:[#allocation0] sm:$0x1] %vm93, %v92
    %s96 = sshll.u32 1, 1
    %s97 = ssub.s32 %s96, 1
    %v99 = vld [vmem:[#allocation0] sm:%s97]
    %s100 = sshll.u32 1, 1
    %s101 = ssub.s32 %s100, 1
    %102 = vst [vmem:[%s1] sm:%s101] %v99

// kernel: residual_block_forward.5
$region0: #{residual_block_forward.5}
  #allocation0 [shape = 'u32[]', space=smem, size = 0x4, offset = 0x4, fixed_abs, tag = 'smem constant byte address 0x4 - core index']
  #allocation1 [shape = 'u32[144,128]{1,0:T(1,128)}', space=vmem, size = 0x12000, scoped, tag = 'internal scratch']
  %s0 = inlined_call_operand.vmem [shape: f32[2,24,128], index: 0, kind: input, shape index: {}]
  %s1 = inlined_call_operand.vmem [shape: f32[2,24,128], index: 1, kind: input, shape index: {}]
  %s2 = inlined_call_operand.vmem [shape: f32[1,128], index: 2, kind: input, shape index: {}]
  %s3 = inlined_call_operand.vmem [shape: f32[1,128], index: 3, kind: input, shape index: {}]
  %s4 = inlined_call_operand.vmem [shape: f32[2,24,128], index: 4, kind: output, shape index: {}]
  %s5 = sld [smem:[#allocation0]]
  $region49: #{residual_block_forward.5} parent=0
    _
  %s7 = ssub.s32 1, %s5
  %s8 = scalar_select 0, %s7, %s5
  loop: start=0, step=1, limit=4
  $region2: #{residual_block_forward.5} parent=0 // loop_pre_header
    _
  $region3: #{residual_block_forward.5} parent=0 // loop_header
    %s10 = sphi 0, %s14
    %p11 = scmp.ge.s32.totalorder %s10, 4
    %s20 = sphi 0, %s22
    %s23 = sphi 0, %s20
    %s24 = sphi 0, %s23
    %s40 = sphi 0, %s24
    %s46 = sphi 0, %s48
    %s49 = sphi 0, %s46
    %s50 = sphi 0, %s49
    %s66 = sphi 0, %s50
    %s70 = sphi 0, %s70
    %s72 = sphi 0, %s70
    %s73 = sphi 0, %s72
    %s87 = sphi 0, %s73
    %s91 = sphi 0, %s91
    %s93 = sphi 0, %s91
    %s94 = sphi 0, %s93
    %s108 = sphi 0, %s94
    %s114 = sphi 0, %s116
    %s117 = sphi 0, %s114
    %s118 = sphi 0, %s117
    %s134 = sphi 0, %s118
  $region4: #{residual_block_forward.5} parent=0 // loop_header_branch
    %13 = sbr.rel (%p11) target = $region8
  $region5: #{residual_block_forward.5} parent=0 // loop_body
    %s15 = ssub.s32 %s10, 1
    %s16 = ssub.s32 %s10, 2
    %s17 = sadd.s32 %s10, 1
    %s18 = ssub.s32 %s10, %s17
    %p19 = scmp.eq.s32.totalorder %s18, 0
    %s21 = sadd.s32 %s20, 1
    %s22 = scalar_select %p19, %s20, %s21
    %p25 = pneg %p19
    %p26 = scmp.eq.s32.totalorder %s10, 1
    %p27 = por %p25, %p26
    %p28 = scmp.ne.s32.totalorder %s20, %s23
    %p29 = scmp.eq.s32.totalorder %s10, 0
    %p30 = por %p28, %p29
    %p31 = scmp.ne.s32.totalorder %s20, %s23
    %p32 = scmp.eq.s32.totalorder %s15, 1
    %p33 = por %p31, %p32
    %p34 = scmp.ne.s32.totalorder %s23, %s24
    %p35 = scmp.eq.s32.totalorder %s15, 0
    %p36 = por %p34, %p35
    %p37 = scmp.ne.s32.totalorder %s23, %s24
    %p38 = scmp.eq.s32.totalorder %s16, 1
    %p39 = por %p37, %p38
    %p41 = scmp.ne.s32.totalorder %s24, %s40
    %p42 = scmp.eq.s32.totalorder %s16, 0
    %p43 = por %p41, %p42
    %s44 = ssub.s32 %s10, %s17
    %p45 = scmp.eq.s32.totalorder %s44, 0
    %s47 = sadd.s32 %s46, 1
    %s48 = scalar_select %p45, %s46, %s47
    %p51 = pneg %p45
    %p52 = scmp.eq.s32.totalorder %s10, 1
    %p53 = por %p51, %p52
    %p54 = scmp.ne.s32.totalorder %s46, %s49
    %p55 = scmp.eq.s32.totalorder %s10, 0
    %p56 = por %p54, %p55
    %p57 = scmp.ne.s32.totalorder %s46, %s49
    %p58 = scmp.eq.s32.totalorder %s15, 1
    %p59 = por %p57, %p58
    %p60 = scmp.ne.s32.totalorder %s49, %s50
    %p61 = scmp.eq.s32.totalorder %s15, 0
    %p62 = por %p60, %p61
    %p63 = scmp.ne.s32.totalorder %s49, %s50
    %p64 = scmp.eq.s32.totalorder %s16, 1
    %p65 = por %p63, %p64
    %p67 = scmp.ne.s32.totalorder %s50, %s66
    %p68 = scmp.eq.s32.totalorder %s16, 0
    %p69 = por %p67, %p68
    %s71 = sadd.s32 %s70, 1
    %p74 = scmp.eq.s32.totalorder %s10, 1
    %p75 = scmp.ne.s32.totalorder %s70, %s72
    %p76 = scmp.eq.s32.totalorder %s10, 0
    %p77 = por %p75, %p76
    %p78 = scmp.ne.s32.totalorder %s70, %s72
    %p79 = scmp.eq.s32.totalorder %s15, 1
    %p80 = por %p78, %p79
    %p81 = scmp.ne.s32.totalorder %s72, %s73
    %p82 = scmp.eq.s32.totalorder %s15, 0
    %p83 = por %p81, %p82
    %p84 = scmp.ne.s32.totalorder %s72, %s73
    %p85 = scmp.eq.s32.totalorder %s16, 1
    %p86 = por %p84, %p85
    %p88 = scmp.ne.s32.totalorder %s73, %s87
    %p89 = scmp.eq.s32.totalorder %s16, 0
    %p90 = por %p88, %p89
    %s92 = sadd.s32 %s91, 1
    %p95 = scmp.eq.s32.totalorder %s10, 1
    %p96 = scmp.ne.s32.totalorder %s91, %s93
    %p97 = scmp.eq.s32.totalorder %s10, 0
    %p98 = por %p96, %p97
    %p99 = scmp.ne.s32.totalorder %s91, %s93
    %p100 = scmp.eq.s32.totalorder %s15, 1
    %p101 = por %p99, %p100
    %p102 = scmp.ne.s32.totalorder %s93, %s94
    %p103 = scmp.eq.s32.totalorder %s15, 0
    %p104 = por %p102, %p103
    %p105 = scmp.ne.s32.totalorder %s93, %s94
    %p106 = scmp.eq.s32.totalorder %s16, 1
    %p107 = por %p105, %p106
    %p109 = scmp.ne.s32.totalorder %s94, %s108
    %p110 = scmp.eq.s32.totalorder %s16, 0
    %p111 = por %p109, %p110
    %s112 = ssub.s32 %s10, %s17
    %p113 = scmp.eq.s32.totalorder %s112, 0
    %s115 = sadd.s32 %s114, 1
    %s116 = scalar_select %p113, %s114, %s115
    %p119 = pneg %p113
    %p120 = scmp.eq.s32.totalorder %s10, 1
    %p121 = por %p119, %p120
    %p122 = scmp.ne.s32.totalorder %s114, %s117
    %p123 = scmp.eq.s32.totalorder %s10, 0
    %p124 = por %p122, %p123
    %p125 = scmp.ne.s32.totalorder %s114, %s117
    %p126 = scmp.eq.s32.totalorder %s15, 1
    %p127 = por %p125, %p126
    %p128 = scmp.ne.s32.totalorder %s117, %s118
    %p129 = scmp.eq.s32.totalorder %s15, 0
    %p130 = por %p128, %p129
    %p131 = scmp.ne.s32.totalorder %s117, %s118
    %p132 = scmp.eq.s32.totalorder %s16, 1
    %p133 = por %p131, %p132
    %p135 = scmp.ne.s32.totalorder %s118, %s134
    %p136 = scmp.eq.s32.totalorder %s16, 0
    %p137 = por %p135, %p136
    %p138 = scmp.le.s32.totalorder 1, %s10
    %p139 = scmp.lt.s32.totalorder %s10, 3
    %p140 = pnand %p138, %p139
    %p141 = pneg %p140
    // Predicated region
    $region9: #{residual_block_forward.5} parent=5 // pred_check
      _
    $region10: #{residual_block_forward.5} parent=5 // pred_check_branch
      %143 = sbr.rel (%p140) target = $region12
    $region11: #{residual_block_forward.5} parent=5 // pred_region
      %s144 = ssub.s32 %s10, 1
      // Predicated region
      $region13: #{residual_block_forward.5} parent=11 // pred_check
        %p145 = pneg %p83
      $region14: #{residual_block_forward.5} parent=11 // pred_check_branch
        %147 = sbr.rel (%p145) target = $region16
      $region15: #{residual_block_forward.5} parent=11 // pred_region
        _
      $region16: #{residual_block_forward.5} parent=11 // pred_fallthru
        _
      // Predicated region
      $region17: #{residual_block_forward.5} parent=11 // pred_check
        %p148 = pneg %p104
      $region18: #{residual_block_forward.5} parent=11 // pred_check_branch
        %150 = sbr.rel (%p148) target = $region20
      $region19: #{residual_block_forward.5} parent=11 // pred_region
        _
      $region20: #{residual_block_forward.5} parent=11 // pred_fallthru
        _
    $region12: #{residual_block_forward.5} parent=5 // pred_fallthru
      _
    %p151 = scmp.lt.s32.totalorder %s10, 2
    // Predicated region
    $region21: #{residual_block_forward.5} parent=5 // pred_check
      %p152 = pneg %p151
    $region22: #{residual_block_forward.5} parent=5 // pred_check_branch
      %154 = sbr.rel (%p152) target = $region24
    $region23: #{residual_block_forward.5} parent=5 // pred_region
      // Predicated region
      $region25: #{residual_block_forward.5} parent=23 // pred_check
        %p155 = pneg %p30
      $region26: #{residual_block_forward.5} parent=23 // pred_check_branch
        %157 = sbr.rel (%p155) target = $region28
      $region27: #{residual_block_forward.5} parent=23 // pred_region
        %p158 = scmp.lt.s32.totalorder %s10, 1
        %s159 = scalar_select %p158, %s10, 1
        %s160 = smul.addr %s159, 3
        %s161 = smul.addr %s160, 8
        %s162 = scalar_lea.vmem %s0, %s161
      $region28: #{residual_block_forward.5} parent=23 // pred_fallthru
        _
      // Predicated region
      $region29: #{residual_block_forward.5} parent=23 // pred_check
        %p163 = pneg %p56
      $region30: #{residual_block_forward.5} parent=23 // pred_check_branch
        %165 = sbr.rel (%p163) target = $region32
      $region31: #{residual_block_forward.5} parent=23 // pred_region
        %p166 = scmp.lt.s32.totalorder %s10, 1
        %s167 = scalar_select %p166, %s10, 1
        %s168 = smul.addr %s167, 3
        %s169 = smul.addr %s168, 8
        %s170 = scalar_lea.vmem %s1, %s169
      $region32: #{residual_block_forward.5} parent=23 // pred_fallthru
        _
    $region24: #{residual_block_forward.5} parent=5 // pred_fallthru
      _
    %p171 = scmp.le.s32.totalorder 1, %s10
    %p172 = scmp.lt.s32.totalorder %s10, 3
    %p173 = pnand %p171, %p172
    %p174 = pneg %p173
    // Predicated region
    $region33: #{residual_block_forward.5} parent=5 // pred_check
      _
    $region34: #{residual_block_forward.5} parent=5 // pred_check_branch
      %176 = sbr.rel (%p173) target = $region36
    $region35: #{residual_block_forward.5} parent=5 // pred_region
      %s177 = ssub.s32 %s10, 1
      %p178 = scmp.lt.s32.totalorder %s15, 1
      %s179 = scalar_select %p178, %s15, 1
      %s180 = smul.addr %s179, 3
      %s181 = smul.addr %s180, 8
      %s182 = scalar_lea.vmem %s0, %s181
      %p183 = pneg %p36
      %p184 = pneg %p33
      %p185 = scmp.lt.s32.totalorder %s15, 1
      %s186 = scalar_select %p185, %s15, 1
      %s187 = smul.addr %s186, 3
      %s188 = smul.addr %s187, 8
      %s189 = scalar_lea.vmem %s1, %s188
      %p190 = pneg %p62
      %p191 = pneg %p59
      %p192 = pneg %p83
      %p193 = pneg %p80
      %p194 = pneg %p104
      %p195 = pneg %p101
      %p196 = pneg %p130
      %p197 = pneg %p127
      %p198 = scmp.lt.s32.totalorder %s15, 1
      %s199 = scalar_select %p198, %s15, 1
      %s200 = smul.addr %s199, 3
      %s201 = smul.addr %s200, 8
      %s202 = scalar_lea.vmem %s4, %s201
      %p203 = scmp.lt.s32.totalorder %s15, 1
      %s204 = scalar_select %p203, %s15, 1
      %s205 = smul.addr %s204, 3
      %s206 = smul.addr %s205, 8
      %s207 = scalar_lea.vmem %s0, %s206
      %p208 = scmp.lt.s32.totalorder %s15, 1
      %s209 = scalar_select %p208, %s15, 1
      %s210 = smul.addr %s209, 3
      %s211 = smul.addr %s210, 8
      %s212 = scalar_lea.vmem %s1, %s211
      %p213 = scmp.lt.s32.totalorder %s15, 1
      %s214 = scalar_select %p213, %s15, 1
      %s215 = smul.addr %s214, 3
      %s216 = smul.addr %s215, 8
      %s217 = scalar_lea.vmem %s4, %s216
      %v218 = vld [vmem:[%s207] sm:$0xff]
      %v219 = vld [vmem:[%s207 + $0x8] sm:$0xff]
      %v220 = vld [vmem:[%s207 + $0x10] sm:$0xff]
      %v221 = vld [vmem:[%s2] sm:$0x1]
      %v223 = vlaneseq
      %v224 = vshrl.u32 %v223, 7
      %v225 = vsub.s32 0, %v224
      %v226 = vrot.slane %v221, %v225
      %v228 = vmul.f32 %v218, %v226
      %v229 = vmul.f32 %v219, %v226
      %v230 = vmul.f32 %v220, %v226
      %v231 = vld [vmem:[%s3] sm:$0x1]
      %v233 = vlaneseq
      %v234 = vshrl.u32 %v233, 7
      %v235 = vsub.s32 0, %v234
      %v236 = vrot.slane %v231, %v235
      %v238 = vadd.f32 %v228, %v236
      %v239 = vadd.f32 %v229, %v236
      %v240 = vadd.f32 %v230, %v236
      %v241 = vld [vmem:[%s212] sm:$0xff]
      %v242 = vld [vmem:[%s212 + $0x8] sm:$0xff]
      %v243 = vld [vmem:[%s212 + $0x10] sm:$0xff]
      %v244 = vadd.f32 %v238, %v241
      %v245 = vadd.f32 %v239, %v242
      %v246 = vadd.f32 %v240, %v243
      %v247 = vmax.f32 %v244, 0.0
      %v248 = vmax.f32 %v245, 0.0
      %v249 = vmax.f32 %v246, 0.0
      %250 = vst [vmem:[%s217] sm:$0xff] %v247
      %251 = vst [vmem:[%s217 + $0x8] sm:$0xff] %v248
      %252 = vst [vmem:[%s217 + $0x10] sm:$0xff] %v249
      %p253 = scmp.lt.s32.totalorder %s15, 1
      %s254 = scalar_select %p253, %s15, 1
      %s255 = smul.addr %s254, 3
      %s256 = smul.addr %s255, 8
      %s257 = scalar_lea.vmem %s4, %s256
      // Predicated region
      $region37: #{residual_block_forward.5} parent=35 // pred_check
        %p258 = pneg %p127
      $region38: #{residual_block_forward.5} parent=35 // pred_check_branch
        %260 = sbr.rel (%p258) target = $region40
      $region39: #{residual_block_forward.5} parent=35 // pred_region
        _
      $region40: #{residual_block_forward.5} parent=35 // pred_fallthru
        _
    $region36: #{residual_block_forward.5} parent=5 // pred_fallthru
      _
    %p261 = scmp.le.s32.totalorder 2, %s10
    // Predicated region
    $region41: #{residual_block_forward.5} parent=5 // pred_check
      %p262 = pneg %p261
    $region42: #{residual_block_forward.5} parent=5 // pred_check_branch
      %264 = sbr.rel (%p262) target = $region44
    $region43: #{residual_block_forward.5} parent=5 // pred_region
      %s265 = ssub.s32 %s10, 2
      // Predicated region
      $region45: #{residual_block_forward.5} parent=43 // pred_check
        %p266 = pneg %p133
      $region46: #{residual_block_forward.5} parent=43 // pred_check_branch
        %268 = sbr.rel (%p266) target = $region48
      $region47: #{residual_block_forward.5} parent=43 // pred_region
        %p269 = scmp.lt.s32.totalorder %s16, 1
        %s270 = scalar_select %p269, %s16, 1
        %s271 = smul.addr %s270, 3
        %s272 = smul.addr %s271, 8
        %s273 = scalar_lea.vmem %s4, %s272
      $region48: #{residual_block_forward.5} parent=43 // pred_fallthru
        _
    $region44: #{residual_block_forward.5} parent=5 // pred_fallthru
      _
  $region6: #{residual_block_forward.5} parent=0 // loop_footer
    %s14 = sadd.s32 1, %s10
  $region7: #{residual_block_forward.5} parent=0 // loop_footer_branch
    %9 = sbr.rel target = $region3
  $region8: #{residual_block_forward.5} parent=0 // loop_exit
    _

// kernel: residual_block_forward.3
$region0: #{residual_block_forward.3}
  #allocation0 [shape = 'u32[]', space=smem, size = 0x4, offset = 0x4, fixed_abs, tag = 'smem constant byte address 0x4 - core index']
  #allocation1 [shape = 'u32[144,128]{1,0:T(1,128)}', space=vmem, size = 0x12000, scoped, tag = 'internal scratch']
  %s0 = inlined_call_operand.vmem [shape: f32[2,24,128], index: 0, kind: input, shape index: {}]
  %s1 = inlined_call_operand.vmem [shape: bf16[3,128,128], index: 1, kind: input, shape index: {}]
  %s2 = inlined_call_operand.vmem [shape: f32[2,24,128], index: 2, kind: output, shape index: {0}]
  %s3 = inlined_call_operand.vmem [shape: f32[2,2,128], index: 3, kind: output, shape index: {1}]
  %4 = xla_tuple %s2, %s3
  %s5 = sld [smem:[#allocation0]]
  $region49: #{residual_block_forward.3} parent=0
    _
  %s7 = ssub.s32 1, %s5
  %s8 = scalar_select 0, %s7, %s5
  loop: start=0, step=1, limit=4
  $region2: #{residual_block_forward.3} parent=0 // loop_pre_header
    _
  $region3: #{residual_block_forward.3} parent=0 // loop_header
    %s10 = sphi 0, %s14
    %p11 = scmp.ge.s32.totalorder %s10, 4
    %s20 = sphi 0, %s22
    %s23 = sphi 0, %s20
    %s24 = sphi 0, %s23
    %s40 = sphi 0, %s24
    %s44 = sphi 0, %s44
    %s46 = sphi 0, %s44
    %s47 = sphi 0, %s46
    %s61 = sphi 0, %s47
    %s67 = sphi 0, %s69
    %s70 = sphi 0, %s67
    %s71 = sphi 0, %s70
    %s87 = sphi 0, %s71
    %s93 = sphi 0, %s95
    %s96 = sphi 0, %s93
    %s97 = sphi 0, %s96
    %s113 = sphi 0, %s97
  $region4: #{residual_block_forward.3} parent=0 // loop_header_branch
    %13 = sbr.rel (%p11) target = $region8
  $region5: #{residual_block_forward.3} parent=0 // loop_body
    %s15 = ssub.s32 %s10, 1
    %s16 = ssub.s32 %s10, 2
    %s17 = sadd.s32 %s10, 1
    %s18 = ssub.s32 %s10, %s17
    %p19 = scmp.eq.s32.totalorder %s18, 0
    %s21 = sadd.s32 %s20, 1
    %s22 = scalar_select %p19, %s20, %s21
    %p25 = pneg %p19
    %p26 = scmp.eq.s32.totalorder %s10, 1
    %p27 = por %p25, %p26
    %p28 = scmp.ne.s32.totalorder %s20, %s23
    %p29 = scmp.eq.s32.totalorder %s10, 0
    %p30 = por %p28, %p29
    %p31 = scmp.ne.s32.totalorder %s20, %s23
    %p32 = scmp.eq.s32.totalorder %s15, 1
    %p33 = por %p31, %p32
    %p34 = scmp.ne.s32.totalorder %s23, %s24
    %p35 = scmp.eq.s32.totalorder %s15, 0
    %p36 = por %p34, %p35
    %p37 = scmp.ne.s32.totalorder %s23, %s24
    %p38 = scmp.eq.s32.totalorder %s16, 1
    %p39 = por %p37, %p38
    %p41 = scmp.ne.s32.totalorder %s24, %s40
    %p42 = scmp.eq.s32.totalorder %s16, 0
    %p43 = por %p41, %p42
    %s45 = sadd.s32 %s44, 1
    %p48 = scmp.eq.s32.totalorder %s10, 1
    %p49 = scmp.ne.s32.totalorder %s44, %s46
    %p50 = scmp.eq.s32.totalorder %s10, 0
    %p51 = por %p49, %p50
    %p52 = scmp.ne.s32.totalorder %s44, %s46
    %p53 = scmp.eq.s32.totalorder %s15, 1
    %p54 = por %p52, %p53
    %p55 = scmp.ne.s32.totalorder %s46, %s47
    %p56 = scmp.eq.s32.totalorder %s15, 0
    %p57 = por %p55, %p56
    %p58 = scmp.ne.s32.totalorder %s46, %s47
    %p59 = scmp.eq.s32.totalorder %s16, 1
    %p60 = por %p58, %p59
    %p62 = scmp.ne.s32.totalorder %s47, %s61
    %p63 = scmp.eq.s32.totalorder %s16, 0
    %p64 = por %p62, %p63
    %s65 = ssub.s32 %s10, %s17
    %p66 = scmp.eq.s32.totalorder %s65, 0
    %s68 = sadd.s32 %s67, 1
    %s69 = scalar_select %p66, %s67, %s68
    %p72 = pneg %p66
    %p73 = scmp.eq.s32.totalorder %s10, 1
    %p74 = por %p72, %p73
    %p75 = scmp.ne.s32.totalorder %s67, %s70
    %p76 = scmp.eq.s32.totalorder %s10, 0
    %p77 = por %p75, %p76
    %p78 = scmp.ne.s32.totalorder %s67, %s70
    %p79 = scmp.eq.s32.totalorder %s15, 1
    %p80 = por %p78, %p79
    %p81 = scmp.ne.s32.totalorder %s70, %s71
    %p82 = scmp.eq.s32.totalorder %s15, 0
    %p83 = por %p81, %p82
    %p84 = scmp.ne.s32.totalorder %s70, %s71
    %p85 = scmp.eq.s32.totalorder %s16, 1
    %p86 = por %p84, %p85
    %p88 = scmp.ne.s32.totalorder %s71, %s87
    %p89 = scmp.eq.s32.totalorder %s16, 0
    %p90 = por %p88, %p89
    %s91 = ssub.s32 %s10, %s17
    %p92 = scmp.eq.s32.totalorder %s91, 0
    %s94 = sadd.s32 %s93, 1
    %s95 = scalar_select %p92, %s93, %s94
    %p98 = pneg %p92
    %p99 = scmp.eq.s32.totalorder %s10, 1
    %p100 = por %p98, %p99
    %p101 = scmp.ne.s32.totalorder %s93, %s96
    %p102 = scmp.eq.s32.totalorder %s10, 0
    %p103 = por %p101, %p102
    %p104 = scmp.ne.s32.totalorder %s93, %s96
    %p105 = scmp.eq.s32.totalorder %s15, 1
    %p106 = por %p104, %p105
    %p107 = scmp.ne.s32.totalorder %s96, %s97
    %p108 = scmp.eq.s32.totalorder %s15, 0
    %p109 = por %p107, %p108
    %p110 = scmp.ne.s32.totalorder %s96, %s97
    %p111 = scmp.eq.s32.totalorder %s16, 1
    %p112 = por %p110, %p111
    %p114 = scmp.ne.s32.totalorder %s97, %s113
    %p115 = scmp.eq.s32.totalorder %s16, 0
    %p116 = por %p114, %p115
    %p117 = scmp.le.s32.totalorder 1, %s10
    %p118 = scmp.lt.s32.totalorder %s10, 3
    %p119 = pnand %p117, %p118
    %p120 = pneg %p119
    // Predicated region
    $region9: #{residual_block_forward.3} parent=5 // pred_check
      _
    $region10: #{residual_block_forward.3} parent=5 // pred_check_branch
      %122 = sbr.rel (%p119) target = $region12
    $region11: #{residual_block_forward.3} parent=5 // pred_region
      %s123 = ssub.s32 %s10, 1
      // Predicated region
      $region13: #{residual_block_forward.3} parent=11 // pred_check
        %p124 = pneg %p57
      $region14: #{residual_block_forward.3} parent=11 // pred_check_branch
        %126 = sbr.rel (%p124) target = $region16
      $region15: #{residual_block_forward.3} parent=11 // pred_region
        _
      $region16: #{residual_block_forward.3} parent=11 // pred_fallthru
        _
    $region12: #{residual_block_forward.3} parent=5 // pred_fallthru
      _
    %p127 = scmp.lt.s32.totalorder %s10, 2
    // Predicated region
    $region17: #{residual_block_forward.3} parent=5 // pred_check
      %p128 = pneg %p127
    $region18: #{residual_block_forward.3} parent=5 // pred_check_branch
      %130 = sbr.rel (%p128) target = $region20
    $region19: #{residual_block_forward.3} parent=5 // pred_region
      // Predicated region
      $region21: #{residual_block_forward.3} parent=19 // pred_check
        %p131 = pneg %p30
      $region22: #{residual_block_forward.3} parent=19 // pred_check_branch
        %133 = sbr.rel (%p131) target = $region24
      $region23: #{residual_block_forward.3} parent=19 // pred_region
        %p134 = scmp.lt.s32.totalorder %s10, 1
        %s135 = scalar_select %p134, %s10, 1
        %s136 = smul.addr %s135, 3
        %s137 = smul.addr %s136, 8
        %s138 = scalar_lea.vmem %s0, %s137
      $region24: #{residual_block_forward.3} parent=19 // pred_fallthru
        _
    $region20: #{residual_block_forward.3} parent=5 // pred_fallthru
      _
    %p139 = scmp.le.s32.totalorder 1, %s10
    %p140 = scmp.lt.s32.totalorder %s10, 3
    %p141 = pnand %p139, %p140
    %p142 = pneg %p141
    // Predicated region
    $region25: #{residual_block_forward.3} parent=5 // pred_check
      _
    $region26: #{residual_block_forward.3} parent=5 // pred_check_branch
      %144 = sbr.rel (%p141) target = $region28
    $region27: #{residual_block_forward.3} parent=5 // pred_region
      %s145 = ssub.s32 %s10, 1
      %p146 = scmp.lt.s32.totalorder %s15, 1
      %s147 = scalar_select %p146, %s15, 1
      %s148 = smul.addr %s147, 3
      %s149 = smul.addr %s148, 8
      %s150 = scalar_lea.vmem %s0, %s149
      %p151 = pneg %p36
      %p152 = pneg %p33
      %p153 = pneg %p57
      %p154 = pneg %p54
      %p155 = pneg %p83
      %p156 = pneg %p80
      %p157 = scmp.lt.s32.totalorder %s15, 1
      %s158 = scalar_select %p157, %s15, 1
      %s159 = smul.addr %s158, 3
      %s160 = smul.addr %s159, 8
      %s161 = scalar_lea.vmem %s2, %s160
      %p162 = pneg %p109
      %p163 = pneg %p106
      %p164 = scmp.lt.s32.totalorder %s15, 1
      %s165 = scalar_select %p164, %s15, 1
      %s166 = smul.addr %s165, 2
      %s167 = scalar_lea.vmem %s3, %s166
      %p168 = scmp.lt.s32.totalorder %s15, 1
      %s169 = scalar_select %p168, %s15, 1
      %s170 = smul.addr %s169, 3
      %s171 = smul.addr %s170, 8
      %s172 = scalar_lea.vmem %s0, %s171
      %p173 = scmp.lt.s32.totalorder %s15, 1
      %s174 = scalar_select %p173, %s15, 1
      %s175 = smul.addr %s174, 3
      %s176 = smul.addr %s175, 8
      %s177 = scalar_lea.vmem %s2, %s176
      %p178 = scmp.lt.s32.totalorder %s15, 1
      %s179 = scalar_select %p178, %s15, 1
      %s180 = smul.addr %s179, 2
      %s181 = scalar_lea.vmem %s3, %s180
      %v183 = vld [vmem:[%s172] sm:$0xff]
      %v184 = vld [vmem:[%s172 + $0x8] sm:$0xff]
      %v185 = vld [vmem:[%s172 + $0x10] sm:$0xff]
      %v186 = vrot.slane %v183, 7
      %v187 = vrot.slane %v184, 7
      %v188 = vrot.slane %v185, 7
      %v189 = vlaneseq
      %v190 = vshrl.u32 %v189, 7
      %vm191 = vcmp.lt.s32.totalorder %v190, 1
      %v192 = vsel %vm191, %v187, %v188
      %v193 = vsel %vm191, %v186, %v187
      %v194 = vsel %vm191, %v188, %v186
      %v195 = vrot.slane %v183, 1
      %v196 = vrot.slane %v184, 1
      %v197 = vrot.slane %v185, 1
      %vm198 = vcmp.lt.s32.totalorder %v190, 7
      %v199 = vsel %vm198, %v196, %v197
      %v200 = vsel %vm198, %v195, %v196
      %v201 = vsel %vm198, %v197, %v195
      %v202 = vpack.c.bf16 %v193, %v194
      %v203 = vpack.c.bf16 %v192, %v192
      %v204 = vld [vmem:[%s1] sm:$0xf]
      %v205 = vld [vmem:[%s1 + $0x4] sm:$0xf]
      %v206 = vld [vmem:[%s1 + $0x8] sm:$0xf]
      %v207 = vld [vmem:[%s1 + $0xc] sm:$0xf]
      %v208 = vld [vmem:[%s1 + $0x10] sm:$0xf]
      %v209 = vld [vmem:[%s1 + $0x14] sm:$0xf]
      %v210 = vld [vmem:[%s1 + $0x18] sm:$0xf]
      %v211 = vld [vmem:[%s1 + $0x1c] sm:$0xf]
      %v212 = vld [vmem:[%s1 + $0x20] sm:$0xf]
      %v213 = vld [vmem:[%s1 + $0x24] sm:$0xf]
      %v214 = vld [vmem:[%s1 + $0x28] sm:$0xf]
      %v215 = vld [vmem:[%s1 + $0x2c] sm:$0xf]
      %v216 = vld [vmem:[%s1 + $0x30] sm:$0xf]
      %v217 = vld [vmem:[%s1 + $0x34] sm:$0xf]
      %v218 = vld [vmem:[%s1 + $0x38] sm:$0xf]
      %v219 = vld [vmem:[%s1 + $0x3c] sm:$0xf]
      %v220 = vpack.c.bf16 %v184, %v183
      %v221 = vpack.c.bf16 %v185, %v185
      %s222 = scalar_lea.vmem %s1, 64
      %v223 = vld [vmem:[%s222] sm:$0xf]
      %v224 = vld [vmem:[%s222 + $0x4] sm:$0xf]
      %v225 = vld [vmem:[%s222 + $0x8] sm:$0xf]
      %v226 = vld [vmem:[%s222 + $0xc] sm:$0xf]
      %v227 = vld [vmem:[%s222 + $0x10] sm:$0xf]
      %v228 = vld [vmem:[%s222 + $0x14] sm:$0xf]
      %v229 = vld [vmem:[%s222 + $0x18] sm:$0xf]
      %v230 = vld [vmem:[%s222 + $0x1c] sm:$0xf]
      %v231 = vld [vmem:[%s222 + $0x20] sm:$0xf]
      %v232 = vld [vmem:[%s222 + $0x24] sm:$0xf]
      %v233 = vld [vmem:[%s222 + $0x28] sm:$0xf]
      %v234 = vld [vmem:[%s222 + $0x2c] sm:$0xf]
      %v235 = vld [vmem:[%s222 + $0x30] sm:$0xf]
      %v236 = vld [vmem:[%s222 + $0x34] sm:$0xf]
      %v237 = vld [vmem:[%s222 + $0x38] sm:$0xf]
      %v238 = vld [vmem:[%s222 + $0x3c] sm:$0xf]
      %v255 = vunpack.c.l.b16 %v223
      %v256 = vunpack.c.l.b16 %v224
      %v257 = vunpack.c.l.b16 %v225
      %v258 = vunpack.c.l.b16 %v226
      %v259 = vunpack.c.l.b16 %v227
      %v260 = vunpack.c.l.b16 %v228
      %v261 = vunpack.c.l.b16 %v229
      %v262 = vunpack.c.l.b16 %v230
      %v263 = vunpack.c.l.b16 %v231
      %v264 = vunpack.c.l.b16 %v232
      %v265 = vunpack.c.l.b16 %v233
      %v266 = vunpack.c.l.b16 %v234
      %v267 = vunpack.c.l.b16 %v235
      %v268 = vunpack.c.l.b16 %v236
      %v269 = vunpack.c.l.b16 %v237
      %v270 = vunpack.c.l.b16 %v238
      %v271 = vpack.c.b16 %v256, %v255
      %v272 = vpack.c.b16 %v258, %v257
      %v273 = vpack.c.b16 %v260, %v259
      %v274 = vpack.c.b16 %v262, %v261
      %v275 = vpack.c.b16 %v264, %v263
      %v276 = vpack.c.b16 %v266, %v265
      %v277 = vpack.c.b16 %v268, %v267
      %v278 = vpack.c.b16 %v270, %v269
      %287 = vmatprep.subr.bf16.mxu0 0
      %288 = vmatpush1.bf16.msra.mxu0 %v278
      %289 = vmatprep.subr.bf16.mxu0 0
      %290 = vmatpush1.bf16.msra.mxu0 %v277
      %291 = vmatprep.subr.bf16.mxu0 0
      %292 = vmatpush1.bf16.msra.mxu0 %v276
      %293 = vmatprep.subr.bf16.mxu0 0
      %294 = vmatpush1.bf16.msra.mxu0 %v275
      %295 = vmatprep.subr.bf16.mxu0 0
      %296 = vmatpush1.bf16.msra.mxu0 %v274
      %297 = vmatprep.subr.bf16.mxu0 0
      %298 = vmatpush1.bf16.msra.mxu0 %v273
      %299 = vmatprep.subr.bf16.mxu0 0
      %300 = vmatpush1.bf16.msra.mxu0 %v272
      %301 = vmatprep.subr.bf16.mxu0 0
      %302 = vmatpush1.bf16.msra.mxu0 %v271
      %303 = vmatprep.subr.bf16.mxu0 0
      %304 = vmatpush2.bf16.msra.mxu0 0
      %305 = vmatprep.subr.bf16.mxu0 0
      %306 = vmatpush2.bf16.msra.mxu0 0
      %307 = vmatprep.subr.bf16.mxu0 0
      %308 = vmatpush2.bf16.msra.mxu0 0
      %309 = vmatprep.subr.bf16.mxu0 0
      %310 = vmatpush2.bf16.msra.mxu0 0
      %311 = vmatprep.subr.bf16.mxu0 0
      %312 = vmatpush2.bf16.msra.mxu0 0
      %313 = vmatprep.subr.bf16.mxu0 0
      %314 = vmatpush2.bf16.msra.mxu0 0
      %315 = vmatprep.subr.bf16.mxu0 0
      %316 = vmatpush2.bf16.msra.mxu0 0
      %317 = vmatprep.subr.bf16.mxu0 0
      %318 = vmatpush2.bf16.msra.mxu0 0
      %319 = vmatprep.mubr.bf16.mxu0 0
      %320 = vmatmul.mubr.bf16.gmra.mxu0 %v220
      %v321 = vpop.f32.mrf.mxu0
      %v322 = vadd.f32 0.0, %v321
      %v323 = vpop.f32.mrf.mxu0
      %v324 = vpop.f32.mrf.mxu0
      %v325 = vadd.f32 0.0, %v324
      %v326 = vpop.f32.mrf.mxu0
      %327 = vmatprep.mubr.bf16.mxu0 0
      %328 = vmatmul.mubr.bf16.gmra.mxu0 %v221
      %v329 = vpop.f32.mrf.mxu0
      %v330 = vadd.f32 0.0, %v329
      %v331 = vpop.f32.mrf.mxu0
      %v332 = vpop.f32.mrf.mxu0
      %v333 = vpop.f32.mrf.mxu0
      %334 = vdwg.mxu0
      %v351 = vunpack.c.l.b16 %v204
      %v352 = vunpack.c.l.b16 %v205
      %v353 = vunpack.c.l.b16 %v206
      %v354 = vunpack.c.l.b16 %v207
      %v355 = vunpack.c.l.b16 %v208
      %v356 = vunpack.c.l.b16 %v209
      %v357 = vunpack.c.l.b16 %v210
      %v358 = vunpack.c.l.b16 %v211
      %v359 = vunpack.c.l.b16 %v212
      %v360 = vunpack.c.l.b16 %v213
      %v361 = vunpack.c.l.b16 %v214
      %v362 = vunpack.c.l.b16 %v215
      %v363 = vunpack.c.l.b16 %v216
      %v364 = vunpack.c.l.b16 %v217
      %v365 = vunpack.c.l.b16 %v218
      %v366 = vunpack.c.l.b16 %v219
      %v367 = vpack.c.b16 %v352, %v351
      %v368 = vpack.c.b16 %v354, %v353
      %v369 = vpack.c.b16 %v356, %v355
      %v370 = vpack.c.b16 %v358, %v357
      %v371 = vpack.c.b16 %v360, %v359
      %v372 = vpack.c.b16 %v362, %v361
      %v373 = vpack.c.b16 %v364, %v363
      %v374 = vpack.c.b16 %v366, %v365
      %383 = vmatprep.subr.bf16.mxu0 0
      %384 = vmatpush1.bf16.msra.mxu0 %v374
      %385 = vmatprep.subr.bf16.mxu0 0
      %386 = vmatpush1.bf16.msra.mxu0 %v373
      %387 = vmatprep.subr.bf16.mxu0 0
      %388 = vmatpush1.bf16.msra.mxu0 %v372
      %389 = vmatprep.subr.bf16.mxu0 0
      %390 = vmatpush1.bf16.msra.mxu0 %v371
      %391 = vmatprep.subr.bf16.mxu0 0
      %392 = vmatpush1.bf16.msra.mxu0 %v370
      %393 = vmatprep.subr.bf16.mxu0 0
      %394 = vmatpush1.bf16.msra.mxu0 %v369
      %395 = vmatprep.subr.bf16.mxu0 0
      %396 = vmatpush1.bf16.msra.mxu0 %v368
      %397 = vmatprep.subr.bf16.mxu0 0
      %398 = vmatpush1.bf16.msra.mxu0 %v367
      %399 = vmatprep.subr.bf16.mxu0 0
      %400 = vmatpush2.bf16.msra.mxu0 0
      %401 = vmatprep.subr.bf16.mxu0 0
      %402 = vmatpush2.bf16.msra.mxu0 0
      %403 = vmatprep.subr.bf16.mxu0 0
      %404 = vmatpush2.bf16.msra.mxu0 0
      %405 = vmatprep.subr.bf16.mxu0 0
      %406 = vmatpush2.bf16.msra.mxu0 0
      %407 = vmatprep.subr.bf16.mxu0 0
      %408 = vmatpush2.bf16.msra.mxu0 0
      %409 = vmatprep.subr.bf16.mxu0 0
      %410 = vmatpush2.bf16.msra.mxu0 0
      %411 = vmatprep.subr.bf16.mxu0 0
      %412 = vmatpush2.bf16.msra.mxu0 0
      %413 = vmatprep.subr.bf16.mxu0 0
      %414 = vmatpush2.bf16.msra.mxu0 0
      %415 = vmatprep.mubr.bf16.mxu0 0
      %416 = vmatmul.mubr.bf16.gmra.mxu0 %v202
      %v417 = vpop.f32.mrf.mxu0
      %v418 = vadd.f32 %v322, %v417
      %v419 = vpop.f32.mrf.mxu0
      %v420 = vpop.f32.mrf.mxu0
      %v421 = vadd.f32 %v325, %v420
      %v422 = vpop.f32.mrf.mxu0
      %423 = vmatprep.mubr.bf16.mxu0 0
      %424 = vmatmul.mubr.bf16.gmra.mxu0 %v203
      %v425 = vpop.f32.mrf.mxu0
      %v426 = vadd.f32 %v330, %v425
      %v427 = vpop.f32.mrf.mxu0
      %v428 = vpop.f32.mrf.mxu0
      %v429 = vpop.f32.mrf.mxu0
      %430 = vdwg.mxu0
      %v431 = vpack.c.bf16 %v199, %v200
      %v432 = vpack.c.bf16 %v201, %v201
      %s433 = scalar_lea.vmem %s1, 128
      %v434 = vld [vmem:[%s433] sm:$0xf]
      %v435 = vld [vmem:[%s433 + $0x4] sm:$0xf]
      %v436 = vld [vmem:[%s433 + $0x8] sm:$0xf]
      %v437 = vld [vmem:[%s433 + $0xc] sm:$0xf]
      %v438 = vld [vmem:[%s433 + $0x10] sm:$0xf]
      %v439 = vld [vmem:[%s433 + $0x14] sm:$0xf]
      %v440 = vld [vmem:[%s433 + $0x18] sm:$0xf]
      %v441 = vld [vmem:[%s433 + $0x1c] sm:$0xf]
      %v442 = vld [vmem:[%s433 + $0x20] sm:$0xf]
      %v443 = vld [vmem:[%s433 + $0x24] sm:$0xf]
      %v444 = vld [vmem:[%s433 + $0x28] sm:$0xf]
      %v445 = vld [vmem:[%s433 + $0x2c] sm:$0xf]
      %v446 = vld [vmem:[%s433 + $0x30] sm:$0xf]
      %v447 = vld [vmem:[%s433 + $0x34] sm:$0xf]
      %v448 = vld [vmem:[%s433 + $0x38] sm:$0xf]
      %v449 = vld [vmem:[%s433 + $0x3c] sm:$0xf]
      %v466 = vunpack.c.l.b16 %v434
      %v467 = vunpack.c.l.b16 %v435
      %v468 = vunpack.c.l.b16 %v436
      %v469 = vunpack.c.l.b16 %v437
      %v470 = vunpack.c.l.b16 %v438
      %v471 = vunpack.c.l.b16 %v439
      %v472 = vunpack.c.l.b16 %v440
      %v473 = vunpack.c.l.b16 %v441
      %v474 = vunpack.c.l.b16 %v442
      %v475 = vunpack.c.l.b16 %v443
      %v476 = vunpack.c.l.b16 %v444
      %v477 = vunpack.c.l.b16 %v445
      %v478 = vunpack.c.l.b16 %v446
      %v479 = vunpack.c.l.b16 %v447
      %v480 = vunpack.c.l.b16 %v448
      %v481 = vunpack.c.l.b16 %v449
      %v482 = vpack.c.b16 %v467, %v466
      %v483 = vpack.c.b16 %v469, %v468
      %v484 = vpack.c.b16 %v471, %v470
      %v485 = vpack.c.b16 %v473, %v472
      %v486 = vpack.c.b16 %v475, %v474
      %v487 = vpack.c.b16 %v477, %v476
      %v488 = vpack.c.b16 %v479, %v478
      %v489 = vpack.c.b16 %v481, %v480
      %498 = vmatprep.subr.bf16.mxu0 0
      %499 = vmatpush1.bf16.msra.mxu0 %v489
      %500 = vmatprep.subr.bf16.mxu0 0
      %501 = vmatpush1.bf16.msra.mxu0 %v488
      %502 = vmatprep.subr.bf16.mxu0 0
      %503 = vmatpush1.bf16.msra.mxu0 %v487
      %504 = vmatprep.subr.bf16.mxu0 0
      %505 = vmatpush1.bf16.msra.mxu0 %v486
      %506 = vmatprep.subr.bf16.mxu0 0
      %507 = vmatpush1.bf16.msra.mxu0 %v485
      %508 = vmatprep.subr.bf16.mxu0 0
      %509 = vmatpush1.bf16.msra.mxu0 %v484
      %510 = vmatprep.subr.bf16.mxu0 0
      %511 = vmatpush1.bf16.msra.mxu0 %v483
      %512 = vmatprep.subr.bf16.mxu0 0
      %513 = vmatpush1.bf16.msra.mxu0 %v482
      %514 = vmatprep.subr.bf16.mxu0 0
      %515 = vmatpush2.bf16.msra.mxu0 0
      %516 = vmatprep.subr.bf16.mxu0 0
      %517 = vmatpush2.bf16.msra.mxu0 0
      %518 = vmatprep.subr.bf16.mxu0 0
      %519 = vmatpush2.bf16.msra.mxu0 0
      %520 = vmatprep.subr.bf16.mxu0 0
      %521 = vmatpush2.bf16.msra.mxu0 0
      %522 = vmatprep.subr.bf16.mxu0 0
      %523 = vmatpush2.bf16.msra.mxu0 0
      %524 = vmatprep.subr.bf16.mxu0 0
      %525 = vmatpush2.bf16.msra.mxu0 0
      %526 = vmatprep.subr.bf16.mxu0 0
      %527 = vmatpush2.bf16.msra.mxu0 0
      %528 = vmatprep.subr.bf16.mxu0 0
      %529 = vmatpush2.bf16.msra.mxu0 0
      %530 = vmatprep.mubr.bf16.mxu0 0
      %531 = vmatmul.mubr.bf16.gmra.mxu0 %v431
      %v532 = vpop.f32.mrf.mxu0
      %v533 = vadd.f32 0.0, %v532
      %v534 = vpop.f32.mrf.mxu0
      %v535 = vpop.f32.mrf.mxu0
      %v536 = vadd.f32 0.0, %v535
      %v537 = vpop.f32.mrf.mxu0
      %538 = vmatprep.mubr.bf16.mxu0 0
      %539 = vmatmul.mubr.bf16.gmra.mxu0 %v432
      %v540 = vpop.f32.mrf.mxu0
      %v541 = vadd.f32 0.0, %v540
      %v542 = vpop.f32.mrf.mxu0
      %v543 = vpop.f32.mrf.mxu0
      %v544 = vpop.f32.mrf.mxu0
      %545 = vdwg.mxu0
      %v546 = vadd.f32 %v418, %v533
      %v547 = vadd.f32 %v421, %v536
      %v548 = vadd.f32 %v426, %v541
      %549 = vst [vmem:[%s177] sm:$0xff] %v546
      %550 = vst [vmem:[%s177 + $0x8] sm:$0xff] %v547
      %551 = vst [vmem:[%s177 + $0x10] sm:$0xff] %v548
      %v552 = vadd.s32 %v190, 8
      %v553 = vadd.s32 %v190, 16
      %vm554 = vcmp.ge.s32.totalorder %v190, 1
      %vm555 = vcmp.ge.s32.totalorder %v552, 1
      %vm556 = vcmp.ge.s32.totalorder %v553, 1
      %vm557 = vcmp.le.s32.totalorder %v190, 16
      %vm558 = vcmp.le.s32.totalorder %v552, 16
      %vm559 = vcmp.le.s32.totalorder %v553, 16
      %vm560 = vmand %vm554, %vm557
      %vm561 = vmand %vm555, %vm558
      %vm562 = vmand %vm556, %vm559
      %v563 = vsel %vm560, 1, 0
      %v564 = vsel %vm561, 1, 0
      %v565 = vsel %vm562, 1, 0
      %v566 = vcvt.s32.f32 %v563
      %v567 = vcvt.s32.f32 %v564
      %v568 = vcvt.s32.f32 %v565
      %v569 = vmul.f32 %v546, %v566
      %v570 = vmul.f32 %v547, %v567
      %v571 = vmul.f32 %v548, %v568
      %v572 = vadd.f32 %v569, %v570
      %v573 = vadd.f32 %v572, %v571
      %v574 = vrot.slane %v573, 4
      %v575 = vadd.f32 %v573, %v574
      %v576 = vrot.slane %v575, 2
      %v577 = vadd.f32 %v575, %v576
      %v578 = vrot.slane %v577, 1
      %v579 = vadd.f32 %v577, %v578
      %580 = vst [vmem:[%s181] sm:$0x1] %v579
      %v581 = vmul.f32 %v569, %v569
      %v582 = vmul.f32 %v570, %v570
      %v583 = vmul.f32 %v571, %v571
      %v584 = vadd.f32 %v581, %v582
      %v585 = vadd.f32 %v584, %v583
      %v586 = vrot.slane %v585, 4
      %v587 = vadd.f32 %v585, %v586
      %v588 = vrot.slane %v587, 2
      %v589 = vadd.f32 %v587, %v588
      %v590 = vrot.slane %v589, 1
      %v591 = vadd.f32 %v589, %v590
      %592 = vst [vmem:[%s181 + $0x1] sm:$0x1] %v591
      %p593 = scmp.lt.s32.totalorder %s15, 1
      %s594 = scalar_select %p593, %s15, 1
      %s595 = smul.addr %s594, 3
      %s596 = smul.addr %s595, 8
      %s597 = scalar_lea.vmem %s2, %s596
      %p598 = scmp.lt.s32.totalorder %s15, 1
      %s599 = scalar_select %p598, %s15, 1
      %s600 = smul.addr %s599, 2
      %s601 = scalar_lea.vmem %s3, %s600
      // Predicated region
      $region29: #{residual_block_forward.3} parent=27 // pred_check
        %p602 = pneg %p80
      $region30: #{residual_block_forward.3} parent=27 // pred_check_branch
        %604 = sbr.rel (%p602) target = $region32
      $region31: #{residual_block_forward.3} parent=27 // pred_region
        _
      $region32: #{residual_block_forward.3} parent=27 // pred_fallthru
        _
      // Predicated region
      $region33: #{residual_block_forward.3} parent=27 // pred_check
        %p605 = pneg %p106
      $region34: #{residual_block_forward.3} parent=27 // pred_check_branch
        %607 = sbr.rel (%p605) target = $region36
      $region35: #{residual_block_forward.3} parent=27 // pred_region
        _
      $region36: #{residual_block_forward.3} parent=27 // pred_fallthru
        _
    $region28: #{residual_block_forward.3} parent=5 // pred_fallthru
      _
    %p608 = scmp.le.s32.totalorder 2, %s10
    // Predicated region
    $region37: #{residual_block_forward.3} parent=5 // pred_check
      %p609 = pneg %p608
    $region38: #{residual_block_forward.3} parent=5 // pred_check_branch
      %611 = sbr.rel (%p609) target = $region40
    $region39: #{residual_block_forward.3} parent=5 // pred_region
      %s612 = ssub.s32 %s10, 2
      // Predicated region
      $region41: #{residual_block_forward.3} parent=39 // pred_check
        %p613 = pneg %p86
      $region42: #{residual_block_forward.3} parent=39 // pred_check_branch
        %615 = sbr.rel (%p613) target = $region44
      $region43: #{residual_block_forward.3} parent=39 // pred_region
        %p616 = scmp.lt.s32.totalorder %s16, 1
        %s617 = scalar_select %p616, %s16, 1
        %s618 = smul.addr %s617, 3
        %s619 = smul.addr %s618, 8
        %s620 = scalar_lea.vmem %s2, %s619
      $region44: #{residual_block_forward.3} parent=39 // pred_fallthru
        _
      // Predicated region
      $region45: #{residual_block_forward.3} parent=39 // pred_check
        %p621 = pneg %p112
      $region46: #{residual_block_forward.3} parent=39 // pred_check_branch
        %623 = sbr.rel (%p621) target = $region48
      $region47: #{residual_block_forward.3} parent=39 // pred_region
        %p624 = scmp.lt.s32.totalorder %s16, 1
        %s625 = scalar_select %p624, %s16, 1
        %s626 = smul.addr %s625, 2
        %s627 = scalar_lea.vmem %s3, %s626
      $region48: #{residual_block_forward.3} parent=39 // pred_fallthru
        _
    $region40: #{residual_block_forward.3} parent=5 // pred_fallthru
      _
  $region6: #{residual_block_forward.3} parent=0 // loop_footer
    %s14 = sadd.s32 1, %s10
  $region7: #{residual_block_forward.3} parent=0 // loop_footer_branch
    %9 = sbr.rel target = $region3
  $region8: #{residual_block_forward.3} parent=0 // loop_exit
    _

// kernel: residual_block_forward.4
$region0: #{residual_block_forward.4}
  #allocation0 [shape = 'u32[]', space=smem, size = 0x4, offset = 0x4, fixed_abs, tag = 'smem constant byte address 0x4 - core index']
  #allocation1 [shape = 'u32[144,128]{1,0:T(1,128)}', space=vmem, size = 0x12000, scoped, tag = 'internal scratch']
  %s0 = inlined_call_operand.vmem [shape: f32[2,24,128], index: 0, kind: input, shape index: {}]
  %s1 = inlined_call_operand.vmem [shape: f32[1,128], index: 1, kind: input, shape index: {}]
  %s2 = inlined_call_operand.vmem [shape: f32[1,128], index: 2, kind: input, shape index: {}]
  %s3 = inlined_call_operand.vmem [shape: bf16[3,128,128], index: 3, kind: input, shape index: {}]
  %s4 = inlined_call_operand.vmem [shape: f32[2,24,128], index: 4, kind: output, shape index: {0}]
  %s5 = inlined_call_operand.vmem [shape: f32[2,2,128], index: 5, kind: output, shape index: {1}]
  %6 = xla_tuple %s4, %s5
  %s7 = sld [smem:[#allocation0]]
  $region57: #{residual_block_forward.4} parent=0
    _
  %s9 = ssub.s32 1, %s7
  %s10 = scalar_select 0, %s9, %s7
  loop: start=0, step=1, limit=4
  $region2: #{residual_block_forward.4} parent=0 // loop_pre_header
    _
  $region3: #{residual_block_forward.4} parent=0 // loop_header
    %s12 = sphi 0, %s16
    %p13 = scmp.ge.s32.totalorder %s12, 4
    %s22 = sphi 0, %s24
    %s25 = sphi 0, %s22
    %s26 = sphi 0, %s25
    %s42 = sphi 0, %s26
    %s46 = sphi 0, %s46
    %s48 = sphi 0, %s46
    %s49 = sphi 0, %s48
    %s63 = sphi 0, %s49
    %s67 = sphi 0, %s67
    %s69 = sphi 0, %s67
    %s70 = sphi 0, %s69
    %s84 = sphi 0, %s70
    %s88 = sphi 0, %s88
    %s90 = sphi 0, %s88
    %s91 = sphi 0, %s90
    %s105 = sphi 0, %s91
    %s111 = sphi 0, %s113
    %s114 = sphi 0, %s111
    %s115 = sphi 0, %s114
    %s131 = sphi 0, %s115
    %s137 = sphi 0, %s139
    %s140 = sphi 0, %s137
    %s141 = sphi 0, %s140
    %s157 = sphi 0, %s141
  $region4: #{residual_block_forward.4} parent=0 // loop_header_branch
    %15 = sbr.rel (%p13) target = $region8
  $region5: #{residual_block_forward.4} parent=0 // loop_body
    %s17 = ssub.s32 %s12, 1
    %s18 = ssub.s32 %s12, 2
    %s19 = sadd.s32 %s12, 1
    %s20 = ssub.s32 %s12, %s19
    %p21 = scmp.eq.s32.totalorder %s20, 0
    %s23 = sadd.s32 %s22, 1
    %s24 = scalar_select %p21, %s22, %s23
    %p27 = pneg %p21
    %p28 = scmp.eq.s32.totalorder %s12, 1
    %p29 = por %p27, %p28
    %p30 = scmp.ne.s32.totalorder %s22, %s25
    %p31 = scmp.eq.s32.totalorder %s12, 0
    %p32 = por %p30, %p31
    %p33 = scmp.ne.s32.totalorder %s22, %s25
    %p34 = scmp.eq.s32.totalorder %s17, 1
    %p35 = por %p33, %p34
    %p36 = scmp.ne.s32.totalorder %s25, %s26
    %p37 = scmp.eq.s32.totalorder %s17, 0
    %p38 = por %p36, %p37
    %p39 = scmp.ne.s32.totalorder %s25, %s26
    %p40 = scmp.eq.s32.totalorder %s18, 1
    %p41 = por %p39, %p40
    %p43 = scmp.ne.s32.totalorder %s26, %s42
    %p44 = scmp.eq.s32.totalorder %s18, 0
    %p45 = por %p43, %p44
    %s47 = sadd.s32 %s46, 1
    %p50 = scmp.eq.s32.totalorder %s12, 1
    %p51 = scmp.ne.s32.totalorder %s46, %s48
    %p52 = scmp.eq.s32.totalorder %s12, 0
    %p53 = por %p51, %p52
    %p54 = scmp.ne.s32.totalorder %s46, %s48
    %p55 = scmp.eq.s32.totalorder %s17, 1
    %p56 = por %p54, %p55
    %p57 = scmp.ne.s32.totalorder %s48, %s49
    %p58 = scmp.eq.s32.totalorder %s17, 0
    %p59 = por %p57, %p58
    %p60 = scmp.ne.s32.totalorder %s48, %s49
    %p61 = scmp.eq.s32.totalorder %s18, 1
    %p62 = por %p60, %p61
    %p64 = scmp.ne.s32.totalorder %s49, %s63
    %p65 = scmp.eq.s32.totalorder %s18, 0
    %p66 = por %p64, %p65
    %s68 = sadd.s32 %s67, 1
    %p71 = scmp.eq.s32.totalorder %s12, 1
    %p72 = scmp.ne.s32.totalorder %s67, %s69
    %p73 = scmp.eq.s32.totalorder %s12, 0
    %p74 = por %p72, %p73
    %p75 = scmp.ne.s32.totalorder %s67, %s69
    %p76 = scmp.eq.s32.totalorder %s17, 1
    %p77 = por %p75, %p76
    %p78 = scmp.ne.s32.totalorder %s69, %s70
    %p79 = scmp.eq.s32.totalorder %s17, 0
    %p80 = por %p78, %p79
    %p81 = scmp.ne.s32.totalorder %s69, %s70
    %p82 = scmp.eq.s32.totalorder %s18, 1
    %p83 = por %p81, %p82
    %p85 = scmp.ne.s32.totalorder %s70, %s84
    %p86 = scmp.eq.s32.totalorder %s18, 0
    %p87 = por %p85, %p86
    %s89 = sadd.s32 %s88, 1
    %p92 = scmp.eq.s32.totalorder %s12, 1
    %p93 = scmp.ne.s32.totalorder %s88, %s90
    %p94 = scmp.eq.s32.totalorder %s12, 0
    %p95 = por %p93, %p94
    %p96 = scmp.ne.s32.totalorder %s88, %s90
    %p97 = scmp.eq.s32.totalorder %s17, 1
    %p98 = por %p96, %p97
    %p99 = scmp.ne.s32.totalorder %s90, %s91
    %p100 = scmp.eq.s32.totalorder %s17, 0
    %p101 = por %p99, %p100
    %p102 = scmp.ne.s32.totalorder %s90, %s91
    %p103 = scmp.eq.s32.totalorder %s18, 1
    %p104 = por %p102, %p103
    %p106 = scmp.ne.s32.totalorder %s91, %s105
    %p107 = scmp.eq.s32.totalorder %s18, 0
    %p108 = por %p106, %p107
    %s109 = ssub.s32 %s12, %s19
    %p110 = scmp.eq.s32.totalorder %s109, 0
    %s112 = sadd.s32 %s111, 1
    %s113 = scalar_select %p110, %s111, %s112
    %p116 = pneg %p110
    %p117 = scmp.eq.s32.totalorder %s12, 1
    %p118 = por %p116, %p117
    %p119 = scmp.ne.s32.totalorder %s111, %s114
    %p120 = scmp.eq.s32.totalorder %s12, 0
    %p121 = por %p119, %p120
    %p122 = scmp.ne.s32.totalorder %s111, %s114
    %p123 = scmp.eq.s32.totalorder %s17, 1
    %p124 = por %p122, %p123
    %p125 = scmp.ne.s32.totalorder %s114, %s115
    %p126 = scmp.eq.s32.totalorder %s17, 0
    %p127 = por %p125, %p126
    %p128 = scmp.ne.s32.totalorder %s114, %s115
    %p129 = scmp.eq.s32.totalorder %s18, 1
    %p130 = por %p128, %p129
    %p132 = scmp.ne.s32.totalorder %s115, %s131
    %p133 = scmp.eq.s32.totalorder %s18, 0
    %p134 = por %p132, %p133
    %s135 = ssub.s32 %s12, %s19
    %p136 = scmp.eq.s32.totalorder %s135, 0
    %s138 = sadd.s32 %s137, 1
    %s139 = scalar_select %p136, %s137, %s138
    %p142 = pneg %p136
    %p143 = scmp.eq.s32.totalorder %s12, 1
    %p144 = por %p142, %p143
    %p145 = scmp.ne.s32.totalorder %s137, %s140
    %p146 = scmp.eq.s32.totalorder %s12, 0
    %p147 = por %p145, %p146
    %p148 = scmp.ne.s32.totalorder %s137, %s140
    %p149 = scmp.eq.s32.totalorder %s17, 1
    %p150 = por %p148, %p149
    %p151 = scmp.ne.s32.totalorder %s140, %s141
    %p152 = scmp.eq.s32.totalorder %s17, 0
    %p153 = por %p151, %p152
    %p154 = scmp.ne.s32.totalorder %s140, %s141
    %p155 = scmp.eq.s32.totalorder %s18, 1
    %p156 = por %p154, %p155
    %p158 = scmp.ne.s32.totalorder %s141, %s157
    %p159 = scmp.eq.s32.totalorder %s18, 0
    %p160 = por %p158, %p159
    %p161 = scmp.le.s32.totalorder 1, %s12
    %p162 = scmp.lt.s32.totalorder %s12, 3
    %p163 = pnand %p161, %p162
    %p164 = pneg %p163
    // Predicated region
    $region9: #{residual_block_forward.4} parent=5 // pred_check
      _
    $region10: #{residual_block_forward.4} parent=5 // pred_check_branch
      %166 = sbr.rel (%p163) target = $region12
    $region11: #{residual_block_forward.4} parent=5 // pred_region
      %s167 = ssub.s32 %s12, 1
      // Predicated region
      $region13: #{residual_block_forward.4} parent=11 // pred_check
        %p168 = pneg %p59
      $region14: #{residual_block_forward.4} parent=11 // pred_check_branch
        %170 = sbr.rel (%p168) target = $region16
      $region15: #{residual_block_forward.4} parent=11 // pred_region
        _
      $region16: #{residual_block_forward.4} parent=11 // pred_fallthru
        _
      // Predicated region
      $region17: #{residual_block_forward.4} parent=11 // pred_check
        %p171 = pneg %p80
      $region18: #{residual_block_forward.4} parent=11 // pred_check_branch
        %173 = sbr.rel (%p171) target = $region20
      $region19: #{residual_block_forward.4} parent=11 // pred_region
        _
      $region20: #{residual_block_forward.4} parent=11 // pred_fallthru
        _
      // Predicated region
      $region21: #{residual_block_forward.4} parent=11 // pred_check
        %p174 = pneg %p101
      $region22: #{residual_block_forward.4} parent=11 // pred_check_branch
        %176 = sbr.rel (%p174) target = $region24
      $region23: #{residual_block_forward.4} parent=11 // pred_region
        _
      $region24: #{residual_block_forward.4} parent=11 // pred_fallthru
        _
    $region12: #{residual_block_forward.4} parent=5 // pred_fallthru
      _
    %p177 = scmp.lt.s32.totalorder %s12, 2
    // Predicated region
    $region25: #{residual_block_forward.4} parent=5 // pred_check
      %p178 = pneg %p177
    $region26: #{residual_block_forward.4} parent=5 // pred_check_branch
      %180 = sbr.rel (%p178) target = $region28
    $region27: #{residual_block_forward.4} parent=5 // pred_region
      // Predicated region
      $region29: #{residual_block_forward.4} parent=27 // pred_check
        %p181 = pneg %p32
      $region30: #{residual_block_forward.4} parent=27 // pred_check_branch
        %183 = sbr.rel (%p181) target = $region32
      $region31: #{residual_block_forward.4} parent=27 // pred_region
        %p184 = scmp.lt.s32.totalorder %s12, 1
        %s185 = scalar_select %p184, %s12, 1
        %s186 = smul.addr %s185, 3
        %s187 = smul.addr %s186, 8
        %s188 = scalar_lea.vmem %s0, %s187
      $region32: #{residual_block_forward.4} parent=27 // pred_fallthru
        _
    $region28: #{residual_block_forward.4} parent=5 // pred_fallthru
      _
    %p189 = scmp.le.s32.totalorder 1, %s12
    %p190 = scmp.lt.s32.totalorder %s12, 3
    %p191 = pnand %p189, %p190
    %p192 = pneg %p191
    // Predicated region
    $region33: #{residual_block_forward.4} parent=5 // pred_check
      _
    $region34: #{residual_block_forward.4} parent=5 // pred_check_branch
      %194 = sbr.rel (%p191) target = $region36
    $region35: #{residual_block_forward.4} parent=5 // pred_region
      %s195 = ssub.s32 %s12, 1
      %p196 = scmp.lt.s32.totalorder %s17, 1
      %s197 = scalar_select %p196, %s17, 1
      %s198 = smul.addr %s197, 3
      %s199 = smul.addr %s198, 8
      %s200 = scalar_lea.vmem %s0, %s199
      %p201 = pneg %p38
      %p202 = pneg %p35
      %p203 = pneg %p59
      %p204 = pneg %p56
      %p205 = pneg %p80
      %p206 = pneg %p77
      %p207 = pneg %p101
      %p208 = pneg %p98
      %p209 = pneg %p127
      %p210 = pneg %p124
      %p211 = scmp.lt.s32.totalorder %s17, 1
      %s212 = scalar_select %p211, %s17, 1
      %s213 = smul.addr %s212, 3
      %s214 = smul.addr %s213, 8
      %s215 = scalar_lea.vmem %s4, %s214
      %p216 = pneg %p153
      %p217 = pneg %p150
      %p218 = scmp.lt.s32.totalorder %s17, 1
      %s219 = scalar_select %p218, %s17, 1
      %s220 = smul.addr %s219, 2
      %s221 = scalar_lea.vmem %s5, %s220
      %p222 = scmp.lt.s32.totalorder %s17, 1
      %s223 = scalar_select %p222, %s17, 1
      %s224 = smul.addr %s223, 3
      %s225 = smul.addr %s224, 8
      %s226 = scalar_lea.vmem %s0, %s225
      %p227 = scmp.lt.s32.totalorder %s17, 1
      %s228 = scalar_select %p227, %s17, 1
      %s229 = smul.addr %s228, 3
      %s230 = smul.addr %s229, 8
      %s231 = scalar_lea.vmem %s4, %s230
      %p232 = scmp.lt.s32.totalorder %s17, 1
      %s233 = scalar_select %p232, %s17, 1
      %s234 = smul.addr %s233, 2
      %s235 = scalar_lea.vmem %s5, %s234
      %v237 = vlaneseq
      %v238 = vshrl.u32 %v237, 7
      %v239 = vadd.s32 %v238, 8
      %v240 = vadd.s32 %v238, 16
      %vm241 = vcmp.ge.s32.totalorder %v238, 1
      %vm242 = vcmp.ge.s32.totalorder %v239, 1
      %vm243 = vcmp.ge.s32.totalorder %v240, 1
      %vm244 = vcmp.le.s32.totalorder %v238, 16
      %vm245 = vcmp.le.s32.totalorder %v239, 16
      %vm246 = vcmp.le.s32.totalorder %v240, 16
      %vm247 = vmand %vm241, %vm244
      %vm248 = vmand %vm242, %vm245
      %vm249 = vmand %vm243, %vm246
      %v250 = vsel %vm247, 1, 0
      %v251 = vsel %vm248, 1, 0
      %v252 = vsel %vm249, 1, 0
      %v253 = vcvt.s32.f32 %v250
      %v254 = vcvt.s32.f32 %v251
      %v255 = vcvt.s32.f32 %v252
      %v256 = vld [vmem:[%s226] sm:$0xff]
      %v257 = vld [vmem:[%s226 + $0x8] sm:$0xff]
      %v258 = vld [vmem:[%s226 + $0x10] sm:$0xff]
      %v259 = vld [vmem:[%s1] sm:$0x1]
      %v261 = vlaneseq
      %v262 = vshrl.u32 %v261, 7
      %v263 = vsub.s32 0, %v262
      %v264 = vrot.slane %v259, %v263
      %v266 = vmul.f32 %v256, %v264
      %v267 = vmul.f32 %v257, %v264
      %v268 = vmul.f32 %v258, %v264
      %v269 = vld [vmem:[%s2] sm:$0x1]
      %v271 = vlaneseq
      %v272 = vshrl.u32 %v271, 7
      %v273 = vsub.s32 0, %v272
      %v274 = vrot.slane %v269, %v273
      %v276 = vadd.f32 %v266, %v274
      %v277 = vadd.f32 %v267, %v274
      %v278 = vadd.f32 %v268, %v274
      %v279 = vmax.f32 %v276, 0.0
      %v280 = vmax.f32 %v277, 0.0
      %v281 = vmax.f32 %v278, 0.0
      %v282 = vmul.f32 %v279, %v253
      %v283 = vmul.f32 %v280, %v254
      %v284 = vmul.f32 %v281, %v255
      %v285 = vrot.slane %v282, 7
      %v286 = vrot.slane %v283, 7
      %v287 = vrot.slane %v284, 7
      %vm288 = vcmp.lt.s32.totalorder %v238, 1
      %v289 = vsel %vm288, %v286, %v287
      %v290 = vsel %vm288, %v285, %v286
      %v291 = vsel %vm288, %v287, %v285
      %v292 = vrot.slane %v282, 1
      %v293 = vrot.slane %v283, 1
      %v294 = vrot.slane %v284, 1
      %vm295 = vcmp.lt.s32.totalorder %v238, 7
      %v296 = vsel %vm295, %v293, %v294
      %v297 = vsel %vm295, %v292, %v293
      %v298 = vsel %vm295, %v294, %v292
      %v299 = vpack.c.bf16 %v290, %v291
      %v300 = vpack.c.bf16 %v289, %v289
      %v301 = vld [vmem:[%s3] sm:$0xf]
      %v302 = vld [vmem:[%s3 + $0x4] sm:$0xf]
      %v303 = vld [vmem:[%s3 + $0x8] sm:$0xf]
      %v304 = vld [vmem:[%s3 + $0xc] sm:$0xf]
      %v305 = vld [vmem:[%s3 + $0x10] sm:$0xf]
      %v306 = vld [vmem:[%s3 + $0x14] sm:$0xf]
      %v307 = vld [vmem:[%s3 + $0x18] sm:$0xf]
      %v308 = vld [vmem:[%s3 + $0x1c] sm:$0xf]
      %v309 = vld [vmem:[%s3 + $0x20] sm:$0xf]
      %v310 = vld [vmem:[%s3 + $0x24] sm:$0xf]
      %v311 = vld [vmem:[%s3 + $0x28] sm:$0xf]
      %v312 = vld [vmem:[%s3 + $0x2c] sm:$0xf]
      %v313 = vld [vmem:[%s3 + $0x30] sm:$0xf]
      %v314 = vld [vmem:[%s3 + $0x34] sm:$0xf]
      %v315 = vld [vmem:[%s3 + $0x38] sm:$0xf]
      %v316 = vld [vmem:[%s3 + $0x3c] sm:$0xf]
      %v317 = vpack.c.bf16 %v283, %v282
      %v318 = vpack.c.bf16 %v284, %v284
      %s319 = scalar_lea.vmem %s3, 64
      %v320 = vld [vmem:[%s319] sm:$0xf]
      %v321 = vld [vmem:[%s319 + $0x4] sm:$0xf]
      %v322 = vld [vmem:[%s319 + $0x8] sm:$0xf]
      %v323 = vld [vmem:[%s319 + $0xc] sm:$0xf]
      %v324 = vld [vmem:[%s319 + $0x10] sm:$0xf]
      %v325 = vld [vmem:[%s319 + $0x14] sm:$0xf]
      %v326 = vld [vmem:[%s319 + $0x18] sm:$0xf]
      %v327 = vld [vmem:[%s319 + $0x1c] sm:$0xf]
      %v328 = vld [vmem:[%s319 + $0x20] sm:$0xf]
      %v329 = vld [vmem:[%s319 + $0x24] sm:$0xf]
      %v330 = vld [vmem:[%s319 + $0x28] sm:$0xf]
      %v331 = vld [vmem:[%s319 + $0x2c] sm:$0xf]
      %v332 = vld [vmem:[%s319 + $0x30] sm:$0xf]
      %v333 = vld [vmem:[%s319 + $0x34] sm:$0xf]
      %v334 = vld [vmem:[%s319 + $0x38] sm:$0xf]
      %v335 = vld [vmem:[%s319 + $0x3c] sm:$0xf]
      %v352 = vunpack.c.l.b16 %v320
      %v353 = vunpack.c.l.b16 %v321
      %v354 = vunpack.c.l.b16 %v322
      %v355 = vunpack.c.l.b16 %v323
      %v356 = vunpack.c.l.b16 %v324
      %v357 = vunpack.c.l.b16 %v325
      %v358 = vunpack.c.l.b16 %v326
      %v359 = vunpack.c.l.b16 %v327
      %v360 = vunpack.c.l.b16 %v328
      %v361 = vunpack.c.l.b16 %v329
      %v362 = vunpack.c.l.b16 %v330
      %v363 = vunpack.c.l.b16 %v331
      %v364 = vunpack.c.l.b16 %v332
      %v365 = vunpack.c.l.b16 %v333
      %v366 = vunpack.c.l.b16 %v334
      %v367 = vunpack.c.l.b16 %v335
      %v368 = vpack.c.b16 %v353, %v352
      %v369 = vpack.c.b16 %v355, %v354
      %v370 = vpack.c.b16 %v357, %v356
      %v371 = vpack.c.b16 %v359, %v358
      %v372 = vpack.c.b16 %v361, %v360
      %v373 = vpack.c.b16 %v363, %v362
      %v374 = vpack.c.b16 %v365, %v364
      %v375 = vpack.c.b16 %v367, %v366
      %384 = vmatprep.subr.bf16.mxu0 0
      %385 = vmatpush1.bf16.msra.mxu0 %v375
      %386 = vmatprep.subr.bf16.mxu0 0
      %387 = vmatpush1.bf16.msra.mxu0 %v374
      %388 = vmatprep.subr.bf16.mxu0 0
      %389 = vmatpush1.bf16.msra.mxu0 %v373
      %390 = vmatprep.subr.bf16.mxu0 0
      %391 = vmatpush1.bf16.msra.mxu0 %v372
      %392 = vmatprep.subr.bf16.mxu0 0
      %393 = vmatpush1.bf16.msra.mxu0 %v371
      %394 = vmatprep.subr.bf16.mxu0 0
      %395 = vmatpush1.bf16.msra.mxu0 %v370
      %396 = vmatprep.subr.bf16.mxu0 0
      %397 = vmatpush1.bf16.msra.mxu0 %v369
      %398 = vmatprep.subr.bf16.mxu0 0
      %399 = vmatpush1.bf16.msra.mxu0 %v368
      %400 = vmatprep.subr.bf16.mxu0 0
      %401 = vmatpush2.bf16.msra.mxu0 0
      %402 = vmatprep.subr.bf16.mxu0 0
      %403 = vmatpush2.bf16.msra.mxu0 0
      %404 = vmatprep.subr.bf16.mxu0 0
      %405 = vmatpush2.bf16.msra.mxu0 0
      %406 = vmatprep.subr.bf16.mxu0 0
      %407 = vmatpush2.bf16.msra.mxu0 0
      %408 = vmatprep.subr.bf16.mxu0 0
      %409 = vmatpush2.bf16.msra.mxu0 0
      %410 = vmatprep.subr.bf16.mxu0 0
      %411 = vmatpush2.bf16.msra.mxu0 0
      %412 = vmatprep.subr.bf16.mxu0 0
      %413 = vmatpush2.bf16.msra.mxu0 0
      %414 = vmatprep.subr.bf16.mxu0 0
      %415 = vmatpush2.bf16.msra.mxu0 0
      %416 = vmatprep.mubr.bf16.mxu0 0
      %417 = vmatmul.mubr.bf16.gmra.mxu0 %v317
      %v418 = vpop.f32.mrf.mxu0
      %v419 = vadd.f32 0.0, %v418
      %v420 = vpop.f32.mrf.mxu0
      %v421 = vpop.f32.mrf.mxu0
      %v422 = vadd.f32 0.0, %v421
      %v423 = vpop.f32.mrf.mxu0
      %424 = vmatprep.mubr.bf16.mxu0 0
      %425 = vmatmul.mubr.bf16.gmra.mxu0 %v318
      %v426 = vpop.f32.mrf.mxu0
      %v427 = vadd.f32 0.0, %v426
      %v428 = vpop.f32.mrf.mxu0
      %v429 = vpop.f32.mrf.mxu0
      %v430 = vpop.f32.mrf.mxu0
      %431 = vdwg.mxu0
      %v448 = vunpack.c.l.b16 %v301
      %v449 = vunpack.c.l.b16 %v302
      %v450 = vunpack.c.l.b16 %v303
      %v451 = vunpack.c.l.b16 %v304
      %v452 = vunpack.c.l.b16 %v305
      %v453 = vunpack.c.l.b16 %v306
      %v454 = vunpack.c.l.b16 %v307
      %v455 = vunpack.c.l.b16 %v308
      %v456 = vunpack.c.l.b16 %v309
      %v457 = vunpack.c.l.b16 %v310
      %v458 = vunpack.c.l.b16 %v311
      %v459 = vunpack.c.l.b16 %v312
      %v460 = vunpack.c.l.b16 %v313
      %v461 = vunpack.c.l.b16 %v314
      %v462 = vunpack.c.l.b16 %v315
      %v463 = vunpack.c.l.b16 %v316
      %v464 = vpack.c.b16 %v449, %v448
      %v465 = vpack.c.b16 %v451, %v450
      %v466 = vpack.c.b16 %v453, %v452
      %v467 = vpack.c.b16 %v455, %v454
      %v468 = vpack.c.b16 %v457, %v456
      %v469 = vpack.c.b16 %v459, %v458
      %v470 = vpack.c.b16 %v461, %v460
      %v471 = vpack.c.b16 %v463, %v462
      %480 = vmatprep.subr.bf16.mxu0 0
      %481 = vmatpush1.bf16.msra.mxu0 %v471
      %482 = vmatprep.subr.bf16.mxu0 0
      %483 = vmatpush1.bf16.msra.mxu0 %v470
      %484 = vmatprep.subr.bf16.mxu0 0
      %485 = vmatpush1.bf16.msra.mxu0 %v469
      %486 = vmatprep.subr.bf16.mxu0 0
      %487 = vmatpush1.bf16.msra.mxu0 %v468
      %488 = vmatprep.subr.bf16.mxu0 0
      %489 = vmatpush1.bf16.msra.mxu0 %v467
      %490 = vmatprep.subr.bf16.mxu0 0
      %491 = vmatpush1.bf16.msra.mxu0 %v466
      %492 = vmatprep.subr.bf16.mxu0 0
      %493 = vmatpush1.bf16.msra.mxu0 %v465
      %494 = vmatprep.subr.bf16.mxu0 0
      %495 = vmatpush1.bf16.msra.mxu0 %v464
      %496 = vmatprep.subr.bf16.mxu0 0
      %497 = vmatpush2.bf16.msra.mxu0 0
      %498 = vmatprep.subr.bf16.mxu0 0
      %499 = vmatpush2.bf16.msra.mxu0 0
      %500 = vmatprep.subr.bf16.mxu0 0
      %501 = vmatpush2.bf16.msra.mxu0 0
      %502 = vmatprep.subr.bf16.mxu0 0
      %503 = vmatpush2.bf16.msra.mxu0 0
      %504 = vmatprep.subr.bf16.mxu0 0
      %505 = vmatpush2.bf16.msra.mxu0 0
      %506 = vmatprep.subr.bf16.mxu0 0
      %507 = vmatpush2.bf16.msra.mxu0 0
      %508 = vmatprep.subr.bf16.mxu0 0
      %509 = vmatpush2.bf16.msra.mxu0 0
      %510 = vmatprep.subr.bf16.mxu0 0
      %511 = vmatpush2.bf16.msra.mxu0 0
      %512 = vmatprep.mubr.bf16.mxu0 0
      %513 = vmatmul.mubr.bf16.gmra.mxu0 %v299
      %v514 = vpop.f32.mrf.mxu0
      %v515 = vadd.f32 %v419, %v514
      %v516 = vpop.f32.mrf.mxu0
      %v517 = vpop.f32.mrf.mxu0
      %v518 = vadd.f32 %v422, %v517
      %v519 = vpop.f32.mrf.mxu0
      %520 = vmatprep.mubr.bf16.mxu0 0
      %521 = vmatmul.mubr.bf16.gmra.mxu0 %v300
      %v522 = vpop.f32.mrf.mxu0
      %v523 = vadd.f32 %v427, %v522
      %v524 = vpop.f32.mrf.mxu0
      %v525 = vpop.f32.mrf.mxu0
      %v526 = vpop.f32.mrf.mxu0
      %527 = vdwg.mxu0
      %v528 = vpack.c.bf16 %v296, %v297
      %v529 = vpack.c.bf16 %v298, %v298
      %s530 = scalar_lea.vmem %s3, 128
      %v531 = vld [vmem:[%s530] sm:$0xf]
      %v532 = vld [vmem:[%s530 + $0x4] sm:$0xf]
      %v533 = vld [vmem:[%s530 + $0x8] sm:$0xf]
      %v534 = vld [vmem:[%s530 + $0xc] sm:$0xf]
      %v535 = vld [vmem:[%s530 + $0x10] sm:$0xf]
      %v536 = vld [vmem:[%s530 + $0x14] sm:$0xf]
      %v537 = vld [vmem:[%s530 + $0x18] sm:$0xf]
      %v538 = vld [vmem:[%s530 + $0x1c] sm:$0xf]
      %v539 = vld [vmem:[%s530 + $0x20] sm:$0xf]
      %v540 = vld [vmem:[%s530 + $0x24] sm:$0xf]
      %v541 = vld [vmem:[%s530 + $0x28] sm:$0xf]
      %v542 = vld [vmem:[%s530 + $0x2c] sm:$0xf]
      %v543 = vld [vmem:[%s530 + $0x30] sm:$0xf]
      %v544 = vld [vmem:[%s530 + $0x34] sm:$0xf]
      %v545 = vld [vmem:[%s530 + $0x38] sm:$0xf]
      %v546 = vld [vmem:[%s530 + $0x3c] sm:$0xf]
      %v563 = vunpack.c.l.b16 %v531
      %v564 = vunpack.c.l.b16 %v532
      %v565 = vunpack.c.l.b16 %v533
      %v566 = vunpack.c.l.b16 %v534
      %v567 = vunpack.c.l.b16 %v535
      %v568 = vunpack.c.l.b16 %v536
      %v569 = vunpack.c.l.b16 %v537
      %v570 = vunpack.c.l.b16 %v538
      %v571 = vunpack.c.l.b16 %v539
      %v572 = vunpack.c.l.b16 %v540
      %v573 = vunpack.c.l.b16 %v541
      %v574 = vunpack.c.l.b16 %v542
      %v575 = vunpack.c.l.b16 %v543
      %v576 = vunpack.c.l.b16 %v544
      %v577 = vunpack.c.l.b16 %v545
      %v578 = vunpack.c.l.b16 %v546
      %v579 = vpack.c.b16 %v564, %v563
      %v580 = vpack.c.b16 %v566, %v565
      %v581 = vpack.c.b16 %v568, %v567
      %v582 = vpack.c.b16 %v570, %v569
      %v583 = vpack.c.b16 %v572, %v571
      %v584 = vpack.c.b16 %v574, %v573
      %v585 = vpack.c.b16 %v576, %v575
      %v586 = vpack.c.b16 %v578, %v577
      %595 = vmatprep.subr.bf16.mxu0 0
      %596 = vmatpush1.bf16.msra.mxu0 %v586
      %597 = vmatprep.subr.bf16.mxu0 0
      %598 = vmatpush1.bf16.msra.mxu0 %v585
      %599 = vmatprep.subr.bf16.mxu0 0
      %600 = vmatpush1.bf16.msra.mxu0 %v584
      %601 = vmatprep.subr.bf16.mxu0 0
      %602 = vmatpush1.bf16.msra.mxu0 %v583
      %603 = vmatprep.subr.bf16.mxu0 0
      %604 = vmatpush1.bf16.msra.mxu0 %v582
      %605 = vmatprep.subr.bf16.mxu0 0
      %606 = vmatpush1.bf16.msra.mxu0 %v581
      %607 = vmatprep.subr.bf16.mxu0 0
      %608 = vmatpush1.bf16.msra.mxu0 %v580
      %609 = vmatprep.subr.bf16.mxu0 0
      %610 = vmatpush1.bf16.msra.mxu0 %v579
      %611 = vmatprep.subr.bf16.mxu0 0
      %612 = vmatpush2.bf16.msra.mxu0 0
      %613 = vmatprep.subr.bf16.mxu0 0
      %614 = vmatpush2.bf16.msra.mxu0 0
      %615 = vmatprep.subr.bf16.mxu0 0
      %616 = vmatpush2.bf16.msra.mxu0 0
      %617 = vmatprep.subr.bf16.mxu0 0
      %618 = vmatpush2.bf16.msra.mxu0 0
      %619 = vmatprep.subr.bf16.mxu0 0
      %620 = vmatpush2.bf16.msra.mxu0 0
      %621 = vmatprep.subr.bf16.mxu0 0
      %622 = vmatpush2.bf16.msra.mxu0 0
      %623 = vmatprep.subr.bf16.mxu0 0
      %624 = vmatpush2.bf16.msra.mxu0 0
      %625 = vmatprep.subr.bf16.mxu0 0
      %626 = vmatpush2.bf16.msra.mxu0 0
      %627 = vmatprep.mubr.bf16.mxu0 0
      %628 = vmatmul.mubr.bf16.gmra.mxu0 %v528
      %v629 = vpop.f32.mrf.mxu0
      %v630 = vadd.f32 0.0, %v629
      %v631 = vpop.f32.mrf.mxu0
      %v632 = vpop.f32.mrf.mxu0
      %v633 = vadd.f32 0.0, %v632
      %v634 = vpop.f32.mrf.mxu0
      %635 = vmatprep.mubr.bf16.mxu0 0
      %636 = vmatmul.mubr.bf16.gmra.mxu0 %v529
      %v637 = vpop.f32.mrf.mxu0
      %v638 = vadd.f32 0.0, %v637
      %v639 = vpop.f32.mrf.mxu0
      %v640 = vpop.f32.mrf.mxu0
      %v641 = vpop.f32.mrf.mxu0
      %642 = vdwg.mxu0
      %v643 = vadd.f32 %v515, %v630
      %v644 = vadd.f32 %v518, %v633
      %v645 = vadd.f32 %v523, %v638
      %646 = vst [vmem:[%s231] sm:$0xff] %v643
      %647 = vst [vmem:[%s231 + $0x8] sm:$0xff] %v644
      %648 = vst [vmem:[%s231 + $0x10] sm:$0xff] %v645
      %v649 = vmul.f32 %v643, %v253
      %v650 = vmul.f32 %v644, %v254
      %v651 = vmul.f32 %v645, %v255
      %v652 = vadd.f32 %v649, %v650
      %v653 = vadd.f32 %v652, %v651
      %v654 = vrot.slane %v653, 4
      %v655 = vadd.f32 %v653, %v654
      %v656 = vrot.slane %v655, 2
      %v657 = vadd.f32 %v655, %v656
      %v658 = vrot.slane %v657, 1
      %v659 = vadd.f32 %v657, %v658
      %660 = vst [vmem:[%s235] sm:$0x1] %v659
      %v661 = vmul.f32 %v649, %v649
      %v662 = vmul.f32 %v650, %v650
      %v663 = vmul.f32 %v651, %v651
      %v664 = vadd.f32 %v661, %v662
      %v665 = vadd.f32 %v664, %v663
      %v666 = vrot.slane %v665, 4
      %v667 = vadd.f32 %v665, %v666
      %v668 = vrot.slane %v667, 2
      %v669 = vadd.f32 %v667, %v668
      %v670 = vrot.slane %v669, 1
      %v671 = vadd.f32 %v669, %v670
      %672 = vst [vmem:[%s235 + $0x1] sm:$0x1] %v671
      %p673 = scmp.lt.s32.totalorder %s17, 1
      %s674 = scalar_select %p673, %s17, 1
      %s675 = smul.addr %s674, 3
      %s676 = smul.addr %s675, 8
      %s677 = scalar_lea.vmem %s4, %s676
      %p678 = scmp.lt.s32.totalorder %s17, 1
      %s679 = scalar_select %p678, %s17, 1
      %s680 = smul.addr %s679, 2
      %s681 = scalar_lea.vmem %s5, %s680
      // Predicated region
      $region37: #{residual_block_forward.4} parent=35 // pred_check
        %p682 = pneg %p124
      $region38: #{residual_block_forward.4} parent=35 // pred_check_branch
        %684 = sbr.rel (%p682) target = $region40
      $region39: #{residual_block_forward.4} parent=35 // pred_region
        _
      $region40: #{residual_block_forward.4} parent=35 // pred_fallthru
        _
      // Predicated region
      $region41: #{residual_block_forward.4} parent=35 // pred_check
        %p685 = pneg %p150
      $region42: #{residual_block_forward.4} parent=35 // pred_check_branch
        %687 = sbr.rel (%p685) target = $region44
      $region43: #{residual_block_forward.4} parent=35 // pred_region
        _
      $region44: #{residual_block_forward.4} parent=35 // pred_fallthru
        _
    $region36: #{residual_block_forward.4} parent=5 // pred_fallthru
      _
    %p688 = scmp.le.s32.totalorder 2, %s12
    // Predicated region
    $region45: #{residual_block_forward.4} parent=5 // pred_check
      %p689 = pneg %p688
    $region46: #{residual_block_forward.4} parent=5 // pred_check_branch
      %691 = sbr.rel (%p689) target = $region48
    $region47: #{residual_block_forward.4} parent=5 // pred_region
      %s692 = ssub.s32 %s12, 2
      // Predicated region
      $region49: #{residual_block_forward.4} parent=47 // pred_check
        %p693 = pneg %p130
      $region50: #{residual_block_forward.4} parent=47 // pred_check_branch
        %695 = sbr.rel (%p693) target = $region52
      $region51: #{residual_block_forward.4} parent=47 // pred_region
        %p696 = scmp.lt.s32.totalorder %s18, 1
        %s697 = scalar_select %p696, %s18, 1
        %s698 = smul.addr %s697, 3
        %s699 = smul.addr %s698, 8
        %s700 = scalar_lea.vmem %s4, %s699
      $region52: #{residual_block_forward.4} parent=47 // pred_fallthru
        _
      // Predicated region
      $region53: #{residual_block_forward.4} parent=47 // pred_check
        %p701 = pneg %p156
      $region54: #{residual_block_forward.4} parent=47 // pred_check_branch
        %703 = sbr.rel (%p701) target = $region56
      $region55: #{residual_block_forward.4} parent=47 // pred_region
        %p704 = scmp.lt.s32.totalorder %s18, 1
        %s705 = scalar_select %p704, %s18, 1
        %s706 = smul.addr %s705, 2
        %s707 = scalar_lea.vmem %s5, %s706
      $region56: #{residual_block_forward.4} parent=47 // pred_fallthru
        _
    $region48: #{residual_block_forward.4} parent=5 // pred_fallthru
      _
  $region6: #{residual_block_forward.4} parent=0 // loop_footer
    %s16 = sadd.s32 1, %s12
  $region7: #{residual_block_forward.4} parent=0 // loop_footer_branch
    %11 = sbr.rel target = $region3
  $region8: #{residual_block_forward.4} parent=0 // loop_exit
    _

</llo_original>
